<compile_context>
chip_gen: v5e
topology: v5e:2x2
jax: 0.10.0
libtpu: 0.0.40
codegen_flags: <defaults>
</compile_context>

<pallas_src>
import math
from functools import partial

import jax
import jax.numpy as jnp
from jax.experimental import pallas as pl
from jax.experimental.pallas import tpu as pltpu


def encoder_layer_kernel(xq_ref, xkv_ref,
                         wq_ref, bq_ref, wk_ref, bk_ref, wv_ref, bv_ref,
                         wo_ref, bo_ref,
                         ln1_g_ref, ln1_b_ref,
                         w1_ref, b1_ref, w2_ref, b2_ref,
                         ln2_g_ref, ln2_b_ref,
                         out_ref,
                         k_cache, v_cache,
                         *, n_heads: int, eps: float = 1e-5):
    f32 = jnp.float32
    bf16 = jnp.bfloat16

    def mm(a, b):                          # a @ b, bf16 operands -> f32 accumulation (MXU)
        return jax.lax.dot_general(a, b, (((1,), (0,)), ((), ())),
                                   preferred_element_type=f32)

    def mm_bt(a, b):                       # a @ b.T (contract dim 1 of both), f32 acc
        return jax.lax.dot_general(a, b, (((1,), (1,)), ((), ())),
                                   preferred_element_type=f32)

    xq = xq_ref[...]                       # (tS, H) f32 query rows (residual path)
    tS, H = xq.shape
    hd = H // n_heads

    # ---- K/V projections: once per batch element, cached in VMEM scratch (bf16).
    #      Lane-dense (S,H)@(H,H) matmuls keep the MXU result dimension full. ----
    @pl.when(pl.program_id(1) == 0)
    def _project_kv():
        xkv = xkv_ref[...]                 # (S, H) bf16 (pre-cast in the wrapper)
        k_cache[...] = (mm(xkv, wk_ref[...]) + bk_ref[...]).astype(bf16)
        v_cache[...] = (mm(xkv, wv_ref[...]) + bv_ref[...]).astype(bf16)

    # ---- Q projection: single lane-dense (tS,H)@(H,H); 1/sqrt(hd) folded into wq/bq. ----
    q_all = (mm(xq.astype(bf16), wq_ref[...]) + bq_ref[...]).astype(bf16)   # (tS, H)
    k_all = k_cache[...]                   # (S, H) bf16
    v_all = v_cache[...]                   # (S, H) bf16

    # ---- per-head attention; contexts concatenated lane-wise so the output
    #      projection is a single K=H matmul. ----
    # TODO(synk): src_mask path (masked_fill with -1e10) not wired in; module default mask=None.
    ctx_heads = []
    for h in range(n_heads):               # small static loop; per-head live set is only s/p/ctx
        lo = h * hd
        q_h = q_all[:, lo:lo + hd]         # (tS, hd) bf16 (already scaled)
        k_h = k_all[:, lo:lo + hd]         # (S,  hd) bf16
        v_h = v_all[:, lo:lo + hd]         # (S,  hd) bf16

        s_h = mm_bt(q_h, k_h)              # (tS, S) f32 scores
        m_h = jnp.max(s_h, axis=-1, keepdims=True)
        p_h = jnp.exp(s_h - m_h)           # f32 softmax stats (portable across v5e/v6e/v7x)
        l_h = jnp.sum(p_h, axis=-1, keepdims=True)

        ctx_h = mm(p_h.astype(bf16), v_h)  # (tS, hd) f32
        # normalize after PV: (tS,hd) multiply instead of (tS,S); exact reciprocal (EUP)
        ctx_heads.append(ctx_h * pl.reciprocal(l_h))

    ctx = jnp.concatenate(ctx_heads, axis=-1).astype(bf16)        # (tS, H)
    attn = mm(ctx, wo_ref[...]) + bo_ref[...]                     # single K=H output proj

    # ---- residual + LayerNorm 1 (f32 statistics) ----
    y = xq + attn
    mu = jnp.mean(y, axis=-1, keepdims=True)
    var = jnp.mean(jnp.square(y - mu), axis=-1, keepdims=True)
    y = (y - mu) * jax.lax.rsqrt(var + eps) * ln1_g_ref[...] + ln1_b_ref[...]

    # ---- feed-forward (bf16 MXU operands, f32 accumulation); dropout = identity ----
    h1 = jnp.maximum(mm(y.astype(bf16), w1_ref[...]) + b1_ref[...], 0.0)    # (tS, P)
    f = mm(h1.astype(bf16), w2_ref[...]) + b2_ref[...]                      # (tS, H)

    # ---- residual + LayerNorm 2 ----
    z = y + f
    mu2 = jnp.mean(z, axis=-1, keepdims=True)
    var2 = jnp.mean(jnp.square(z - mu2), axis=-1, keepdims=True)
    z = (z - mu2) * jax.lax.rsqrt(var2 + eps) * ln2_g_ref[...] + ln2_b_ref[...]

    out_ref[...] = z.astype(out_ref.dtype)


def prepare_params(params, *, n_heads):
    """Cast weights to bf16 and fold the softmax scale into wq/bq.

    Call ONCE and reuse the result across invocations (avoids per-call cast/transpose passes).
    Biases / LN parameters stay f32.
    """
    H = params["wq"].shape[0]
    hd = H // n_heads
    inv_scale = 1.0 / math.sqrt(float(hd))
    bf16, f32 = jnp.bfloat16, jnp.float32
    return {
        "wq": (params["wq"] * inv_scale).astype(bf16),
        "bq": (params["bq"] * inv_scale).astype(f32),
        "wk": params["wk"].astype(bf16), "bk": params["bk"].astype(f32),
        "wv": params["wv"].astype(bf16), "bv": params["bv"].astype(f32),
        "wo": params["wo"].astype(bf16), "bo": params["bo"].astype(f32),
        "ln1_g": params["ln1_g"].astype(f32), "ln1_b": params["ln1_b"].astype(f32),
        "w1": params["w1"].astype(bf16), "b1": params["b1"].astype(f32),
        "w2": params["w2"].astype(bf16), "b2": params["b2"].astype(f32),
        "ln2_g": params["ln2_g"].astype(f32), "ln2_b": params["ln2_b"].astype(f32),
    }


def _pick_row_tile(S, tile_s):
    """Largest divisor of S that is <= tile_s and a multiple of 8 (else largest divisor)."""
    if S <= tile_s:
        return S
    for t in range(min(tile_s, S), 0, -1):
        if S % t == 0 and t % 8 == 0:
            return t
    for t in range(min(tile_s, S), 0, -1):
        if S % t == 0:
            return t
    return S


def encoding_layer(x, prepped, *, n_heads, tile_s=256, eps=1e-5):
    """x: (B, S, H) float32. prepped: output of prepare_params()."""
    B, S, H = x.shape
    P = prepped["w1"].shape[1]
    bf16 = jnp.bfloat16

    tS = _pick_row_tile(S, tile_s)
    n_qt = S // tS

    x_kv = x.astype(bf16)   # K/V-path input in bf16 (halves the full-seq VMEM buffer + DMA)

    def const_spec(shape):
        zeros = (0,) * len(shape)
        return pl.BlockSpec(shape, lambda b, i, z=zeros: z)

    in_specs = [
        pl.BlockSpec((None, tS, H), lambda b, i: (b, i, 0)),   # x  (f32 query rows / residual)
        pl.BlockSpec((None, S, H), lambda b, i: (b, 0, 0)),    # x  (bf16 full sequence, K/V)
        const_spec((H, H)), const_spec((1, H)),                # wq (scaled), bq (scaled)
        const_spec((H, H)), const_spec((1, H)),                # wk, bk
        const_spec((H, H)), const_spec((1, H)),                # wv, bv
        const_spec((H, H)), const_spec((1, H)),                # wo, bo
        const_spec((1, H)), const_spec((1, H)),                # ln1 gamma, beta
        const_spec((H, P)), const_spec((1, P)),                # w1, b1
        const_spec((P, H)), const_spec((1, H)),                # w2, b2
        const_spec((1, H)), const_spec((1, H)),                # ln2 gamma, beta
    ]

    # --- advisory cost estimate ---
    flops = int(2 * B * S * (4 * H * H + 2 * H * P) + 4 * B * S * S * H)
    transcendentals = int(B * n_heads * S * S + 4 * B * S)
    weight_bytes = 2 * (4 * H * H + 2 * H * P)                 # bf16 weights
    bytes_accessed = int(B * S * H * (4 + 2 + 4) + weight_bytes)

    # --- explicit VMEM budget, capped below physical per-core capacity (v7x: 64 MiB/TC) ---
    try:
        vmem_cap = int(pltpu.get_tpu_info().vmem_capacity_bytes)
    except Exception:
        vmem_cap = 128 * 2 ** 20
    kv_cache_bytes = 2 * 2 * S * H                              # two bf16 (S,H) scratch caches
    tile_io_bytes = 2 * (4 * tS * H + 2 * S * H + 4 * tS * H)   # xq, xkv, out (double-buffered)
    act_bytes = 4 * (8 * tS * H + 2 * tS * S + 2 * tS * P)      # live f32 activations
    est = 2 * weight_bytes + kv_cache_bytes + tile_io_bytes + act_bytes
    vmem_limit = int(min(int(0.85 * vmem_cap), max(32 * 2 ** 20, 2 * est)))

    kernel = partial(encoder_layer_kernel, n_heads=n_heads, eps=eps)

    return pl.pallas_call(
        kernel,
        out_shape=jax.ShapeDtypeStruct((B, S, H), x.dtype),
        grid_spec=pltpu.PrefetchScalarGridSpec(
            num_scalar_prefetch=0,
            grid=(B, n_qt),
            in_specs=in_specs,
            out_specs=pl.BlockSpec((None, tS, H), lambda b, i: (b, i, 0)),
            scratch_shapes=[pltpu.VMEM((S, H), bf16),    # K cache (per batch element)
                            pltpu.VMEM((S, H), bf16)],   # V cache
        ),
        compiler_params=pltpu.CompilerParams(
            # axis 0 (batch) parallel (megacore); axis 1 "arbitrary" so the K/V scratch
            # carry across query tiles is valid and never split mid-batch.
            dimension_semantics=("parallel", "arbitrary"),
            vmem_limit_bytes=vmem_limit),
        cost_estimate=pl.CostEstimate(
            flops=flops, transcendentals=transcendentals,
            bytes_accessed=bytes_accessed),
    )(x, x_kv,
      prepped["wq"], prepped["bq"], prepped["wk"], prepped["bk"],
      prepped["wv"], prepped["bv"], prepped["wo"], prepped["bo"],
      prepped["ln1_g"], prepped["ln1_b"],
      prepped["w1"], prepped["b1"], prepped["w2"], prepped["b2"],
      prepped["ln2_g"], prepped["ln2_b"])


def reference_encoding_layer(x, params, *, n_heads, eps=1e-5):
    """Pure-JAX f32 reference mirroring the PyTorch module (dropout = identity)."""
    B, S, H = x.shape
    hd = H // n_heads

    def lin(a, w, b):
        return a @ w + b

    q = lin(x, params["wq"], params["bq"]).reshape(B, S, n_heads, hd).transpose(0, 2, 1, 3)
    k = lin(x, params["wk"], params["bk"]).reshape(B, S, n_heads, hd).transpose(0, 2, 1, 3)
    v = lin(x, params["wv"], params["bv"]).reshape(B, S, n_heads, hd).transpose(0, 2, 1, 3)
    score = jnp.einsum("bhqd,bhkd->bhqk", q, k) / math.sqrt(hd)
    alpha = jax.nn.softmax(score, axis=-1)
    a = jnp.einsum("bhqk,bhkd->bhqd", alpha, v).transpose(0, 2, 1, 3).reshape(B, S, H)
    a = lin(a, params["wo"], params["bo"])

    def layer_norm(y, g, b):
        mu = y.mean(-1, keepdims=True)
        var = ((y - mu) ** 2).mean(-1, keepdims=True)
        return (y - mu) * jax.lax.rsqrt(var + eps) * g + b

    y = layer_norm(x + a, params["ln1_g"], params["ln1_b"])
    f = lin(jnp.maximum(lin(y, params["w1"], params["b1"]), 0.0), params["w2"], params["b2"])
    return layer_norm(y + f, params["ln2_g"], params["ln2_b"])


def init_params(key, hid_dim, pf_dim):
    ks = jax.random.split(key, 6)
    s = 0.02
    return {
        "wq": s * jax.random.normal(ks[0], (hid_dim, hid_dim), jnp.float32),
        "bq": jnp.zeros((1, hid_dim), jnp.float32),
        "wk": s * jax.random.normal(ks[1], (hid_dim, hid_dim), jnp.float32),
        "bk": jnp.zeros((1, hid_dim), jnp.float32),
        "wv": s * jax.random.normal(ks[2], (hid_dim, hid_dim), jnp.float32),
        "bv": jnp.zeros((1, hid_dim), jnp.float32),
        "wo": s * jax.random.normal(ks[3], (hid_dim, hid_dim), jnp.float32),
        "bo": jnp.zeros((1, hid_dim), jnp.float32),
        "ln1_g": jnp.ones((1, hid_dim), jnp.float32),
        "ln1_b": jnp.zeros((1, hid_dim), jnp.float32),
        "w1": s * jax.random.normal(ks[4], (hid_dim, pf_dim), jnp.float32),
        "b1": jnp.zeros((1, pf_dim), jnp.float32),
        "w2": s * jax.random.normal(ks[5], (pf_dim, hid_dim), jnp.float32),
        "b2": jnp.zeros((1, hid_dim), jnp.float32),
        "ln2_g": jnp.ones((1, hid_dim), jnp.float32),
        "ln2_b": jnp.zeros((1, hid_dim), jnp.float32),
    }


def _run_case(key, B, S, H, NH, PF, tile_s):
    k_x, k_p = jax.random.split(key)
    x = jax.random.normal(k_x, (B, S, H), jnp.float32)
    params = init_params(k_p, H, PF)
    prepped = prepare_params(params, n_heads=NH)

    out = encoding_layer(x, prepped, n_heads=NH, tile_s=tile_s)
    out = jax.block_until_ready(out)
    assert out.shape == (B, S, H)

    ref = reference_encoding_layer(x, params, n_heads=NH)
    # bf16 MXU operands -> loosened tolerance vs f32 reference.
    max_err = float(jnp.max(jnp.abs(out - ref)))
    assert max_err < 5e-2, f"mismatch vs reference (B={B},S={S},H={H}): max abs err = {max_err}"


if __name__ == "__main__":
    key = jax.random.PRNGKey(0)
    k1, k2 = jax.random.split(key)

    # Small shapes consistent with the module (single query tile).
    _run_case(k1, B=2, S=8, H=32, NH=4, PF=64, tile_s=256)
    # Slightly larger case that exercises (8,128) tiling and the K/V scratch-cache
    # carry across multiple query-row tiles (n_qt = 2).
    _run_case(k2, B=2, S=256, H=128, NH=4, PF=256, tile_s=128)

    print("KERNEL_OK")
</pallas_src>

<mosaic_0001>
module attributes {stable_mosaic.version = 11 : i64} {
  func.func @encoder_layer_kernel(%arg0: i32, %arg1: i32, %arg2: memref<1x8x32xf32, #tpu.memory_space<vmem>>, %arg3: memref<1x8x32xbf16, #tpu.memory_space<vmem>>, %arg4: memref<32x32xbf16, #tpu.memory_space<vmem>>, %arg5: memref<1x32xf32, #tpu.memory_space<vmem>>, %arg6: memref<32x32xbf16, #tpu.memory_space<vmem>>, %arg7: memref<1x32xf32, #tpu.memory_space<vmem>>, %arg8: memref<32x32xbf16, #tpu.memory_space<vmem>>, %arg9: memref<1x32xf32, #tpu.memory_space<vmem>>, %arg10: memref<32x32xbf16, #tpu.memory_space<vmem>>, %arg11: memref<1x32xf32, #tpu.memory_space<vmem>>, %arg12: memref<1x32xf32, #tpu.memory_space<vmem>>, %arg13: memref<1x32xf32, #tpu.memory_space<vmem>>, %arg14: memref<32x64xbf16, #tpu.memory_space<vmem>>, %arg15: memref<1x64xf32, #tpu.memory_space<vmem>>, %arg16: memref<64x32xbf16, #tpu.memory_space<vmem>>, %arg17: memref<1x32xf32, #tpu.memory_space<vmem>>, %arg18: memref<1x32xf32, #tpu.memory_space<vmem>>, %arg19: memref<1x32xf32, #tpu.memory_space<vmem>>, %arg20: memref<1x8x32xf32, #tpu.memory_space<vmem>>, %arg21: memref<8x32xbf16, #tpu.memory_space<vmem>>, %arg22: memref<8x32xbf16, #tpu.memory_space<vmem>>) attributes {dimension_semantics = [#tpu.dimension_semantics<parallel>, #tpu.dimension_semantics<arbitrary>], iteration_bounds = array<i64: 2, 1>, scalar_prefetch = 0 : i64, scratch_operands = 2 : i64, tpu.core_type = #tpu.core_type<tc>, window_params = [{transform_indices = @transform_0, window_bounds = array<i64: 1, 8, 32>}, {transform_indices = @transform_1, window_bounds = array<i64: 1, 8, 32>}, {pipeline_mode = #tpu.pipeline_mode<synchronous>, transform_indices = @transform_2, window_bounds = array<i64: 32, 32>}, {pipeline_mode = #tpu.pipeline_mode<synchronous>, transform_indices = @transform_3, window_bounds = array<i64: 1, 32>}, {pipeline_mode = #tpu.pipeline_mode<synchronous>, transform_indices = @transform_4, window_bounds = array<i64: 32, 32>}, {pipeline_mode = #tpu.pipeline_mode<synchronous>, transform_indices = @transform_5, window_bounds = array<i64: 1, 32>}, {pipeline_mode = #tpu.pipeline_mode<synchronous>, transform_indices = @transform_6, window_bounds = array<i64: 32, 32>}, {pipeline_mode = #tpu.pipeline_mode<synchronous>, transform_indices = @transform_7, window_bounds = array<i64: 1, 32>}, {pipeline_mode = #tpu.pipeline_mode<synchronous>, transform_indices = @transform_8, window_bounds = array<i64: 32, 32>}, {pipeline_mode = #tpu.pipeline_mode<synchronous>, transform_indices = @transform_9, window_bounds = array<i64: 1, 32>}, {pipeline_mode = #tpu.pipeline_mode<synchronous>, transform_indices = @transform_10, window_bounds = array<i64: 1, 32>}, {pipeline_mode = #tpu.pipeline_mode<synchronous>, transform_indices = @transform_11, window_bounds = array<i64: 1, 32>}, {pipeline_mode = #tpu.pipeline_mode<synchronous>, transform_indices = @transform_12, window_bounds = array<i64: 32, 64>}, {pipeline_mode = #tpu.pipeline_mode<synchronous>, transform_indices = @transform_13, window_bounds = array<i64: 1, 64>}, {pipeline_mode = #tpu.pipeline_mode<synchronous>, transform_indices = @transform_14, window_bounds = array<i64: 64, 32>}, {pipeline_mode = #tpu.pipeline_mode<synchronous>, transform_indices = @transform_15, window_bounds = array<i64: 1, 32>}, {pipeline_mode = #tpu.pipeline_mode<synchronous>, transform_indices = @transform_16, window_bounds = array<i64: 1, 32>}, {pipeline_mode = #tpu.pipeline_mode<synchronous>, transform_indices = @transform_17, window_bounds = array<i64: 1, 32>}, {transform_indices = @transform_18, window_bounds = array<i64: 1, 8, 32>}]} {
    %c0 = arith.constant 0 : index
    %c0_0 = arith.constant 0 : index
    %c0_1 = arith.constant 0 : index
    %0 = vector.load %arg2[%c0, %c0_0, %c0_1] : memref<1x8x32xf32, #tpu.memory_space<vmem>>, vector<1x8x32xf32>
    %1 = vector.shape_cast %0 : vector<1x8x32xf32> to vector<8x32xf32>
    %c0_i32 = arith.constant 0 : i32
    %2 = arith.cmpi eq, %arg1, %c0_i32 : i32
    %3 = arith.extui %2 : i1 to i32
    %c0_i32_2 = arith.constant 0 : i32
    %4 = arith.cmpi ne, %3, %c0_i32_2 : i32
    scf.if %4 {
      %c0_64 = arith.constant 0 : index
      %c0_65 = arith.constant 0 : index
      %c0_66 = arith.constant 0 : index
      %152 = vector.load %arg3[%c0_64, %c0_65, %c0_66] : memref<1x8x32xbf16, #tpu.memory_space<vmem>>, vector<1x8x32xbf16>
      %153 = vector.shape_cast %152 : vector<1x8x32xbf16> to vector<8x32xbf16>
      %c0_67 = arith.constant 0 : index
      %c0_68 = arith.constant 0 : index
      %154 = vector.load %arg6[%c0_67, %c0_68] : memref<32x32xbf16, #tpu.memory_space<vmem>>, vector<32x32xbf16>
      %cst_69 = arith.constant dense<0.000000e+00> : vector<8x32xf32>
      %155 = tpu.matmul %153, %154, %cst_69 {dimension_numbers = #tpu.dot_dimension_numbers<[1], [0], [0], [1], [0, 0, 1, 1], [], []>} : vector<8x32xbf16>, vector<32x32xbf16>, vector<8x32xf32> -> vector<8x32xf32>
      %c0_70 = arith.constant 0 : index
      %c0_71 = arith.constant 0 : index
      %156 = vector.load %arg7[%c0_70, %c0_71] : memref<1x32xf32, #tpu.memory_space<vmem>>, vector<1x32xf32>
      %157 = vector.broadcast %156 : vector<1x32xf32> to vector<8x32xf32>
      %158 = arith.addf %155, %157 : vector<8x32xf32>
      %159 = arith.truncf %158 : vector<8x32xf32> to vector<8x32xbf16>
      %c0_72 = arith.constant 0 : index
      %c0_73 = arith.constant 0 : index
      %160 = vector.load %arg21[%c0_72, %c0_73] : memref<8x32xbf16, #tpu.memory_space<vmem>>, vector<8x32xbf16>
      tpu.vector_store %arg21[%c0_72, %c0_73], %159 {strides = array<i32>} : memref<8x32xbf16, #tpu.memory_space<vmem>>, vector<8x32xbf16>,
      %c0_74 = arith.constant 0 : index
      %c0_75 = arith.constant 0 : index
      %161 = vector.load %arg8[%c0_74, %c0_75] : memref<32x32xbf16, #tpu.memory_space<vmem>>, vector<32x32xbf16>
      %cst_76 = arith.constant dense<0.000000e+00> : vector<8x32xf32>
      %162 = tpu.matmul %153, %161, %cst_76 {dimension_numbers = #tpu.dot_dimension_numbers<[1], [0], [0], [1], [0, 0, 1, 1], [], []>} : vector<8x32xbf16>, vector<32x32xbf16>, vector<8x32xf32> -> vector<8x32xf32>
      %c0_77 = arith.constant 0 : index
      %c0_78 = arith.constant 0 : index
      %163 = vector.load %arg9[%c0_77, %c0_78] : memref<1x32xf32, #tpu.memory_space<vmem>>, vector<1x32xf32>
      %164 = vector.broadcast %163 : vector<1x32xf32> to vector<8x32xf32>
      %165 = arith.addf %162, %164 : vector<8x32xf32>
      %166 = arith.truncf %165 : vector<8x32xf32> to vector<8x32xbf16>
      %c0_79 = arith.constant 0 : index
      %c0_80 = arith.constant 0 : index
      %167 = vector.load %arg22[%c0_79, %c0_80] : memref<8x32xbf16, #tpu.memory_space<vmem>>, vector<8x32xbf16>
      tpu.vector_store %arg22[%c0_79, %c0_80], %166 {strides = array<i32>} : memref<8x32xbf16, #tpu.memory_space<vmem>>, vector<8x32xbf16>,
    } else {
    }
    %5 = arith.truncf %1 : vector<8x32xf32> to vector<8x32xbf16>
    %c0_3 = arith.constant 0 : index
    %c0_4 = arith.constant 0 : index
    %6 = vector.load %arg4[%c0_3, %c0_4] : memref<32x32xbf16, #tpu.memory_space<vmem>>, vector<32x32xbf16>
    %cst = arith.constant dense<0.000000e+00> : vector<8x32xf32>
    %7 = tpu.matmul %5, %6, %cst {dimension_numbers = #tpu.dot_dimension_numbers<[1], [0], [0], [1], [0, 0, 1, 1], [], []>} : vector<8x32xbf16>, vector<32x32xbf16>, vector<8x32xf32> -> vector<8x32xf32>
    %c0_5 = arith.constant 0 : index
    %c0_6 = arith.constant 0 : index
    %8 = vector.load %arg5[%c0_5, %c0_6] : memref<1x32xf32, #tpu.memory_space<vmem>>, vector<1x32xf32>
    %9 = vector.broadcast %8 : vector<1x32xf32> to vector<8x32xf32>
    %10 = arith.addf %7, %9 : vector<8x32xf32>
    %11 = arith.truncf %10 : vector<8x32xf32> to vector<8x32xbf16>
    %c0_7 = arith.constant 0 : index
    %c0_8 = arith.constant 0 : index
    %12 = vector.load %arg21[%c0_7, %c0_8] : memref<8x32xbf16, #tpu.memory_space<vmem>>, vector<8x32xbf16>
    %c0_9 = arith.constant 0 : index
    %c0_10 = arith.constant 0 : index
    %13 = vector.load %arg22[%c0_9, %c0_10] : memref<8x32xbf16, #tpu.memory_space<vmem>>, vector<8x32xbf16>
    %14 = vector.extract_strided_slice %11 {offsets = [0, 0], sizes = [8, 8], strides = [1, 1]} : vector<8x32xbf16> to vector<8x8xbf16>
    %15 = vector.extract_strided_slice %12 {offsets = [0, 0], sizes = [8, 8], strides = [1, 1]} : vector<8x32xbf16> to vector<8x8xbf16>
    %16 = vector.extract_strided_slice %13 {offsets = [0, 0], sizes = [8, 8], strides = [1, 1]} : vector<8x32xbf16> to vector<8x8xbf16>
    %cst_11 = arith.constant dense<0.000000e+00> : vector<8x8xf32>
    %17 = tpu.matmul %14, %15, %cst_11 {dimension_numbers = #tpu.dot_dimension_numbers<[1], [1], [0], [0], [0, 0, 1, 0], [], []>} : vector<8x8xbf16>, vector<8x8xbf16>, vector<8x8xf32> -> vector<8x8xf32>
    %cst_12 = arith.constant dense<0xFF800000> : vector<8xf32>
    %18 = vector.multi_reduction <maximumf>, %17, %cst_12 [1] : vector<8x8xf32> to vector<8xf32>
    %19 = vector.shape_cast %18 : vector<8xf32> to vector<8x1xf32>
    %20 = vector.broadcast %19 : vector<8x1xf32> to vector<8x8xf32>
    %21 = arith.subf %17, %20 : vector<8x8xf32>
    %22 = math.exp %21 : vector<8x8xf32>
    %cst_13 = arith.constant dense<0.000000e+00> : vector<8xf32>
    %23 = vector.multi_reduction <add>, %22, %cst_13 [1] : vector<8x8xf32> to vector<8xf32>
    %24 = vector.shape_cast %23 : vector<8xf32> to vector<8x1xf32>
    %25 = arith.truncf %22 : vector<8x8xf32> to vector<8x8xbf16>
    %cst_14 = arith.constant dense<0.000000e+00> : vector<8x8xf32>
    %26 = tpu.matmul %25, %16, %cst_14 {dimension_numbers = #tpu.dot_dimension_numbers<[1], [0], [0], [1], [0, 0, 1, 1], [], []>} : vector<8x8xbf16>, vector<8x8xbf16>, vector<8x8xf32> -> vector<8x8xf32>
    %27 = tpu.reciprocal %24 : vector<8x1xf32> -> vector<8x1xf32>
    %28 = vector.broadcast %27 : vector<8x1xf32> to vector<8x8xf32>
    %29 = arith.mulf %26, %28 : vector<8x8xf32>
    %30 = vector.extract_strided_slice %11 {offsets = [0, 8], sizes = [8, 8], strides = [1, 1]} : vector<8x32xbf16> to vector<8x8xbf16>
    %31 = vector.extract_strided_slice %12 {offsets = [0, 8], sizes = [8, 8], strides = [1, 1]} : vector<8x32xbf16> to vector<8x8xbf16>
    %32 = vector.extract_strided_slice %13 {offsets = [0, 8], sizes = [8, 8], strides = [1, 1]} : vector<8x32xbf16> to vector<8x8xbf16>
    %cst_15 = arith.constant dense<0.000000e+00> : vector<8x8xf32>
    %33 = tpu.matmul %30, %31, %cst_15 {dimension_numbers = #tpu.dot_dimension_numbers<[1], [1], [0], [0], [0, 0, 1, 0], [], []>} : vector<8x8xbf16>, vector<8x8xbf16>, vector<8x8xf32> -> vector<8x8xf32>
    %cst_16 = arith.constant dense<0xFF800000> : vector<8xf32>
    %34 = vector.multi_reduction <maximumf>, %33, %cst_16 [1] : vector<8x8xf32> to vector<8xf32>
    %35 = vector.shape_cast %34 : vector<8xf32> to vector<8x1xf32>
    %36 = vector.broadcast %35 : vector<8x1xf32> to vector<8x8xf32>
    %37 = arith.subf %33, %36 : vector<8x8xf32>
    %38 = math.exp %37 : vector<8x8xf32>
    %cst_17 = arith.constant dense<0.000000e+00> : vector<8xf32>
    %39 = vector.multi_reduction <add>, %38, %cst_17 [1] : vector<8x8xf32> to vector<8xf32>
    %40 = vector.shape_cast %39 : vector<8xf32> to vector<8x1xf32>
    %41 = arith.truncf %38 : vector<8x8xf32> to vector<8x8xbf16>
    %cst_18 = arith.constant dense<0.000000e+00> : vector<8x8xf32>
    %42 = tpu.matmul %41, %32, %cst_18 {dimension_numbers = #tpu.dot_dimension_numbers<[1], [0], [0], [1], [0, 0, 1, 1], [], []>} : vector<8x8xbf16>, vector<8x8xbf16>, vector<8x8xf32> -> vector<8x8xf32>
    %43 = tpu.reciprocal %40 : vector<8x1xf32> -> vector<8x1xf32>
    %44 = vector.broadcast %43 : vector<8x1xf32> to vector<8x8xf32>
    %45 = arith.mulf %42, %44 : vector<8x8xf32>
    %46 = vector.extract_strided_slice %11 {offsets = [0, 16], sizes = [8, 8], strides = [1, 1]} : vector<8x32xbf16> to vector<8x8xbf16>
    %47 = vector.extract_strided_slice %12 {offsets = [0, 16], sizes = [8, 8], strides = [1, 1]} : vector<8x32xbf16> to vector<8x8xbf16>
    %48 = vector.extract_strided_slice %13 {offsets = [0, 16], sizes = [8, 8], strides = [1, 1]} : vector<8x32xbf16> to vector<8x8xbf16>
    %cst_19 = arith.constant dense<0.000000e+00> : vector<8x8xf32>
    %49 = tpu.matmul %46, %47, %cst_19 {dimension_numbers = #tpu.dot_dimension_numbers<[1], [1], [0], [0], [0, 0, 1, 0], [], []>} : vector<8x8xbf16>, vector<8x8xbf16>, vector<8x8xf32> -> vector<8x8xf32>
    %cst_20 = arith.constant dense<0xFF800000> : vector<8xf32>
    %50 = vector.multi_reduction <maximumf>, %49, %cst_20 [1] : vector<8x8xf32> to vector<8xf32>
    %51 = vector.shape_cast %50 : vector<8xf32> to vector<8x1xf32>
    %52 = vector.broadcast %51 : vector<8x1xf32> to vector<8x8xf32>
    %53 = arith.subf %49, %52 : vector<8x8xf32>
    %54 = math.exp %53 : vector<8x8xf32>
    %cst_21 = arith.constant dense<0.000000e+00> : vector<8xf32>
    %55 = vector.multi_reduction <add>, %54, %cst_21 [1] : vector<8x8xf32> to vector<8xf32>
    %56 = vector.shape_cast %55 : vector<8xf32> to vector<8x1xf32>
    %57 = arith.truncf %54 : vector<8x8xf32> to vector<8x8xbf16>
    %cst_22 = arith.constant dense<0.000000e+00> : vector<8x8xf32>
    %58 = tpu.matmul %57, %48, %cst_22 {dimension_numbers = #tpu.dot_dimension_numbers<[1], [0], [0], [1], [0, 0, 1, 1], [], []>} : vector<8x8xbf16>, vector<8x8xbf16>, vector<8x8xf32> -> vector<8x8xf32>
    %59 = tpu.reciprocal %56 : vector<8x1xf32> -> vector<8x1xf32>
    %60 = vector.broadcast %59 : vector<8x1xf32> to vector<8x8xf32>
    %61 = arith.mulf %58, %60 : vector<8x8xf32>
    %62 = vector.extract_strided_slice %11 {offsets = [0, 24], sizes = [8, 8], strides = [1, 1]} : vector<8x32xbf16> to vector<8x8xbf16>
    %63 = vector.extract_strided_slice %12 {offsets = [0, 24], sizes = [8, 8], strides = [1, 1]} : vector<8x32xbf16> to vector<8x8xbf16>
    %64 = vector.extract_strided_slice %13 {offsets = [0, 24], sizes = [8, 8], strides = [1, 1]} : vector<8x32xbf16> to vector<8x8xbf16>
    %cst_23 = arith.constant dense<0.000000e+00> : vector<8x8xf32>
    %65 = tpu.matmul %62, %63, %cst_23 {dimension_numbers = #tpu.dot_dimension_numbers<[1], [1], [0], [0], [0, 0, 1, 0], [], []>} : vector<8x8xbf16>, vector<8x8xbf16>, vector<8x8xf32> -> vector<8x8xf32>
    %cst_24 = arith.constant dense<0xFF800000> : vector<8xf32>
    %66 = vector.multi_reduction <maximumf>, %65, %cst_24 [1] : vector<8x8xf32> to vector<8xf32>
    %67 = vector.shape_cast %66 : vector<8xf32> to vector<8x1xf32>
    %68 = vector.broadcast %67 : vector<8x1xf32> to vector<8x8xf32>
    %69 = arith.subf %65, %68 : vector<8x8xf32>
    %70 = math.exp %69 : vector<8x8xf32>
    %cst_25 = arith.constant dense<0.000000e+00> : vector<8xf32>
    %71 = vector.multi_reduction <add>, %70, %cst_25 [1] : vector<8x8xf32> to vector<8xf32>
    %72 = vector.shape_cast %71 : vector<8xf32> to vector<8x1xf32>
    %73 = arith.truncf %70 : vector<8x8xf32> to vector<8x8xbf16>
    %cst_26 = arith.constant dense<0.000000e+00> : vector<8x8xf32>
    %74 = tpu.matmul %73, %64, %cst_26 {dimension_numbers = #tpu.dot_dimension_numbers<[1], [0], [0], [1], [0, 0, 1, 1], [], []>} : vector<8x8xbf16>, vector<8x8xbf16>, vector<8x8xf32> -> vector<8x8xf32>
    %75 = tpu.reciprocal %72 : vector<8x1xf32> -> vector<8x1xf32>
    %76 = vector.broadcast %75 : vector<8x1xf32> to vector<8x8xf32>
    %77 = arith.mulf %74, %76 : vector<8x8xf32>
    %78 = tpu.concatenate %29, %45, %61, %77 in 1 : vector<8x8xf32>, vector<8x8xf32>, vector<8x8xf32>, vector<8x8xf32> -> vector<8x32xf32>
    %79 = arith.truncf %78 : vector<8x32xf32> to vector<8x32xbf16>
    %c0_27 = arith.constant 0 : index
    %c0_28 = arith.constant 0 : index
    %80 = vector.load %arg10[%c0_27, %c0_28] : memref<32x32xbf16, #tpu.memory_space<vmem>>, vector<32x32xbf16>
    %cst_29 = arith.constant dense<0.000000e+00> : vector<8x32xf32>
    %81 = tpu.matmul %79, %80, %cst_29 {dimension_numbers = #tpu.dot_dimension_numbers<[1], [0], [0], [1], [0, 0, 1, 1], [], []>} : vector<8x32xbf16>, vector<32x32xbf16>, vector<8x32xf32> -> vector<8x32xf32>
    %c0_30 = arith.constant 0 : index
    %c0_31 = arith.constant 0 : index
    %82 = vector.load %arg11[%c0_30, %c0_31] : memref<1x32xf32, #tpu.memory_space<vmem>>, vector<1x32xf32>
    %83 = vector.broadcast %82 : vector<1x32xf32> to vector<8x32xf32>
    %84 = arith.addf %81, %83 : vector<8x32xf32>
    %85 = arith.addf %1, %84 : vector<8x32xf32>
    %cst_32 = arith.constant dense<0.000000e+00> : vector<8xf32>
    %86 = vector.multi_reduction <add>, %85, %cst_32 [1] : vector<8x32xf32> to vector<8xf32>
    %87 = vector.shape_cast %86 : vector<8xf32> to vector<8x1xf32>
    %cst_33 = arith.constant 3.200000e+01 : f32
    %88 = vector.broadcast %cst_33 : f32 to vector<8x1xf32>
    %89 = arith.divf %87, %88 : vector<8x1xf32>
    %90 = vector.broadcast %89 : vector<8x1xf32> to vector<8x32xf32>
    %91 = arith.subf %85, %90 : vector<8x32xf32>
    %92 = arith.mulf %91, %91 : vector<8x32xf32>
    %cst_34 = arith.constant dense<0.000000e+00> : vector<8xf32>
    %93 = vector.multi_reduction <add>, %92, %cst_34 [1] : vector<8x32xf32> to vector<8xf32>
    %94 = vector.shape_cast %93 : vector<8xf32> to vector<8x1xf32>
    %cst_35 = arith.constant 3.200000e+01 : f32
    %95 = vector.broadcast %cst_35 : f32 to vector<8x1xf32>
    %96 = arith.divf %94, %95 : vector<8x1xf32>
    %97 = vector.broadcast %89 : vector<8x1xf32> to vector<8x32xf32>
    %98 = arith.subf %85, %97 : vector<8x32xf32>
    %cst_36 = arith.constant 9.99999974E-6 : f32
    %99 = vector.broadcast %cst_36 : f32 to vector<8x1xf32>
    %100 = arith.addf %96, %99 : vector<8x1xf32>
    %101 = math.rsqrt %100 : vector<8x1xf32>
    %102 = vector.broadcast %101 : vector<8x1xf32> to vector<8x32xf32>
    %103 = arith.mulf %98, %102 : vector<8x32xf32>
    %c0_37 = arith.constant 0 : index
    %c0_38 = arith.constant 0 : index
    %104 = vector.load %arg12[%c0_37, %c0_38] : memref<1x32xf32, #tpu.memory_space<vmem>>, vector<1x32xf32>
    %105 = vector.broadcast %104 : vector<1x32xf32> to vector<8x32xf32>
    %106 = arith.mulf %103, %105 : vector<8x32xf32>
    %c0_39 = arith.constant 0 : index
    %c0_40 = arith.constant 0 : index
    %107 = vector.load %arg13[%c0_39, %c0_40] : memref<1x32xf32, #tpu.memory_space<vmem>>, vector<1x32xf32>
    %108 = vector.broadcast %107 : vector<1x32xf32> to vector<8x32xf32>
    %109 = arith.addf %106, %108 : vector<8x32xf32>
    %110 = arith.truncf %109 : vector<8x32xf32> to vector<8x32xbf16>
    %c0_41 = arith.constant 0 : index
    %c0_42 = arith.constant 0 : index
    %111 = vector.load %arg14[%c0_41, %c0_42] : memref<32x64xbf16, #tpu.memory_space<vmem>>, vector<32x64xbf16>
    %cst_43 = arith.constant dense<0.000000e+00> : vector<8x64xf32>
    %112 = tpu.matmul %110, %111, %cst_43 {dimension_numbers = #tpu.dot_dimension_numbers<[1], [0], [0], [1], [0, 0, 1, 1], [], []>} : vector<8x32xbf16>, vector<32x64xbf16>, vector<8x64xf32> -> vector<8x64xf32>
    %c0_44 = arith.constant 0 : index
    %c0_45 = arith.constant 0 : index
    %113 = vector.load %arg15[%c0_44, %c0_45] : memref<1x64xf32, #tpu.memory_space<vmem>>, vector<1x64xf32>
    %114 = vector.broadcast %113 : vector<1x64xf32> to vector<8x64xf32>
    %115 = arith.addf %112, %114 : vector<8x64xf32>
    %cst_46 = arith.constant 0.000000e+00 : f32
    %116 = vector.broadcast %cst_46 : f32 to vector<8x64xf32>
    %117 = arith.maximumf %115, %116 : vector<8x64xf32>
    %118 = arith.truncf %117 : vector<8x64xf32> to vector<8x64xbf16>
    %c0_47 = arith.constant 0 : index
    %c0_48 = arith.constant 0 : index
    %119 = vector.load %arg16[%c0_47, %c0_48] : memref<64x32xbf16, #tpu.memory_space<vmem>>, vector<64x32xbf16>
    %cst_49 = arith.constant dense<0.000000e+00> : vector<8x32xf32>
    %120 = tpu.matmul %118, %119, %cst_49 {dimension_numbers = #tpu.dot_dimension_numbers<[1], [0], [0], [1], [0, 0, 1, 1], [], []>} : vector<8x64xbf16>, vector<64x32xbf16>, vector<8x32xf32> -> vector<8x32xf32>
    %c0_50 = arith.constant 0 : index
    %c0_51 = arith.constant 0 : index
    %121 = vector.load %arg17[%c0_50, %c0_51] : memref<1x32xf32, #tpu.memory_space<vmem>>, vector<1x32xf32>
    %122 = vector.broadcast %121 : vector<1x32xf32> to vector<8x32xf32>
    %123 = arith.addf %120, %122 : vector<8x32xf32>
    %124 = arith.addf %109, %123 : vector<8x32xf32>
    %cst_52 = arith.constant dense<0.000000e+00> : vector<8xf32>
    %125 = vector.multi_reduction <add>, %124, %cst_52 [1] : vector<8x32xf32> to vector<8xf32>
    %126 = vector.shape_cast %125 : vector<8xf32> to vector<8x1xf32>
    %cst_53 = arith.constant 3.200000e+01 : f32
    %127 = vector.broadcast %cst_53 : f32 to vector<8x1xf32>
    %128 = arith.divf %126, %127 : vector<8x1xf32>
    %129 = vector.broadcast %128 : vector<8x1xf32> to vector<8x32xf32>
    %130 = arith.subf %124, %129 : vector<8x32xf32>
    %131 = arith.mulf %130, %130 : vector<8x32xf32>
    %cst_54 = arith.constant dense<0.000000e+00> : vector<8xf32>
    %132 = vector.multi_reduction <add>, %131, %cst_54 [1] : vector<8x32xf32> to vector<8xf32>
    %133 = vector.shape_cast %132 : vector<8xf32> to vector<8x1xf32>
    %cst_55 = arith.constant 3.200000e+01 : f32
    %134 = vector.broadcast %cst_55 : f32 to vector<8x1xf32>
    %135 = arith.divf %133, %134 : vector<8x1xf32>
    %136 = vector.broadcast %128 : vector<8x1xf32> to vector<8x32xf32>
    %137 = arith.subf %124, %136 : vector<8x32xf32>
    %cst_56 = arith.constant 9.99999974E-6 : f32
    %138 = vector.broadcast %cst_56 : f32 to vector<8x1xf32>
    %139 = arith.addf %135, %138 : vector<8x1xf32>
    %140 = math.rsqrt %139 : vector<8x1xf32>
    %141 = vector.broadcast %140 : vector<8x1xf32> to vector<8x32xf32>
    %142 = arith.mulf %137, %141 : vector<8x32xf32>
    %c0_57 = arith.constant 0 : index
    %c0_58 = arith.constant 0 : index
    %143 = vector.load %arg18[%c0_57, %c0_58] : memref<1x32xf32, #tpu.memory_space<vmem>>, vector<1x32xf32>
    %144 = vector.broadcast %143 : vector<1x32xf32> to vector<8x32xf32>
    %145 = arith.mulf %142, %144 : vector<8x32xf32>
    %c0_59 = arith.constant 0 : index
    %c0_60 = arith.constant 0 : index
    %146 = vector.load %arg19[%c0_59, %c0_60] : memref<1x32xf32, #tpu.memory_space<vmem>>, vector<1x32xf32>
    %147 = vector.broadcast %146 : vector<1x32xf32> to vector<8x32xf32>
    %148 = arith.addf %145, %147 : vector<8x32xf32>
    %c0_61 = arith.constant 0 : index
    %c0_62 = arith.constant 0 : index
    %c0_63 = arith.constant 0 : index
    %149 = vector.load %arg20[%c0_61, %c0_62, %c0_63] : memref<1x8x32xf32, #tpu.memory_space<vmem>>, vector<1x8x32xf32>
    %150 = vector.shape_cast %149 : vector<1x8x32xf32> to vector<8x32xf32>
    %151 = vector.shape_cast %148 : vector<8x32xf32> to vector<1x8x32xf32>
    tpu.vector_store %arg20[%c0_61, %c0_62, %c0_63], %151 {strides = array<i32>} : memref<1x8x32xf32, #tpu.memory_space<vmem>>, vector<1x8x32xf32>,
    return
  }
  func.func @transform_0(%arg0: i32, %arg1: i32) -> (i32, i32, i32) {
    %c0_i32 = arith.constant 0 : i32
    %c0_i32_0 = arith.constant 0 : i32
    return %arg0, %arg1, %c0_i32 : i32, i32, i32
  }
  func.func @transform_1(%arg0: i32, %arg1: i32) -> (i32, i32, i32) {
    %c0_i32 = arith.constant 0 : i32
    %c0_i32_0 = arith.constant 0 : i32
    %c0_i32_1 = arith.constant 0 : i32
    return %arg0, %c0_i32, %c0_i32_0 : i32, i32, i32
  }
  func.func @transform_2(%arg0: i32, %arg1: i32) -> (i32, i32) {
    %c0_i32 = arith.constant 0 : i32
    %c0_i32_0 = arith.constant 0 : i32
    %c0_i32_1 = arith.constant 0 : i32
    return %c0_i32, %c0_i32_0 : i32, i32
  }
  func.func @transform_3(%arg0: i32, %arg1: i32) -> (i32, i32) {
    %c0_i32 = arith.constant 0 : i32
    %c0_i32_0 = arith.constant 0 : i32
    %c0_i32_1 = arith.constant 0 : i32
    return %c0_i32, %c0_i32_0 : i32, i32
  }
  func.func @transform_4(%arg0: i32, %arg1: i32) -> (i32, i32) {
    %c0_i32 = arith.constant 0 : i32
    %c0_i32_0 = arith.constant 0 : i32
    %c0_i32_1 = arith.constant 0 : i32
    return %c0_i32, %c0_i32_0 : i32, i32
  }
  func.func @transform_5(%arg0: i32, %arg1: i32) -> (i32, i32) {
    %c0_i32 = arith.constant 0 : i32
    %c0_i32_0 = arith.constant 0 : i32
    %c0_i32_1 = arith.constant 0 : i32
    return %c0_i32, %c0_i32_0 : i32, i32
  }
  func.func @transform_6(%arg0: i32, %arg1: i32) -> (i32, i32) {
    %c0_i32 = arith.constant 0 : i32
    %c0_i32_0 = arith.constant 0 : i32
    %c0_i32_1 = arith.constant 0 : i32
    return %c0_i32, %c0_i32_0 : i32, i32
  }
  func.func @transform_7(%arg0: i32, %arg1: i32) -> (i32, i32) {
    %c0_i32 = arith.constant 0 : i32
    %c0_i32_0 = arith.constant 0 : i32
    %c0_i32_1 = arith.constant 0 : i32
    return %c0_i32, %c0_i32_0 : i32, i32
  }
  func.func @transform_8(%arg0: i32, %arg1: i32) -> (i32, i32) {
    %c0_i32 = arith.constant 0 : i32
    %c0_i32_0 = arith.constant 0 : i32
    %c0_i32_1 = arith.constant 0 : i32
    return %c0_i32, %c0_i32_0 : i32, i32
  }
  func.func @transform_9(%arg0: i32, %arg1: i32) -> (i32, i32) {
    %c0_i32 = arith.constant 0 : i32
    %c0_i32_0 = arith.constant 0 : i32
    %c0_i32_1 = arith.constant 0 : i32
    return %c0_i32, %c0_i32_0 : i32, i32
  }
  func.func @transform_10(%arg0: i32, %arg1: i32) -> (i32, i32) {
    %c0_i32 = arith.constant 0 : i32
    %c0_i32_0 = arith.constant 0 : i32
    %c0_i32_1 = arith.constant 0 : i32
    return %c0_i32, %c0_i32_0 : i32, i32
  }
  func.func @transform_11(%arg0: i32, %arg1: i32) -> (i32, i32) {
    %c0_i32 = arith.constant 0 : i32
    %c0_i32_0 = arith.constant 0 : i32
    %c0_i32_1 = arith.constant 0 : i32
    return %c0_i32, %c0_i32_0 : i32, i32
  }
  func.func @transform_12(%arg0: i32, %arg1: i32) -> (i32, i32) {
    %c0_i32 = arith.constant 0 : i32
    %c0_i32_0 = arith.constant 0 : i32
    %c0_i32_1 = arith.constant 0 : i32
    return %c0_i32, %c0_i32_0 : i32, i32
  }
  func.func @transform_13(%arg0: i32, %arg1: i32) -> (i32, i32) {
    %c0_i32 = arith.constant 0 : i32
    %c0_i32_0 = arith.constant 0 : i32
    %c0_i32_1 = arith.constant 0 : i32
    return %c0_i32, %c0_i32_0 : i32, i32
  }
  func.func @transform_14(%arg0: i32, %arg1: i32) -> (i32, i32) {
    %c0_i32 = arith.constant 0 : i32
    %c0_i32_0 = arith.constant 0 : i32
    %c0_i32_1 = arith.constant 0 : i32
    return %c0_i32, %c0_i32_0 : i32, i32
  }
  func.func @transform_15(%arg0: i32, %arg1: i32) -> (i32, i32) {
    %c0_i32 = arith.constant 0 : i32
    %c0_i32_0 = arith.constant 0 : i32
    %c0_i32_1 = arith.constant 0 : i32
    return %c0_i32, %c0_i32_0 : i32, i32
  }
  func.func @transform_16(%arg0: i32, %arg1: i32) -> (i32, i32) {
    %c0_i32 = arith.constant 0 : i32
    %c0_i32_0 = arith.constant 0 : i32
    %c0_i32_1 = arith.constant 0 : i32
    return %c0_i32, %c0_i32_0 : i32, i32
  }
  func.func @transform_17(%arg0: i32, %arg1: i32) -> (i32, i32) {
    %c0_i32 = arith.constant 0 : i32
    %c0_i32_0 = arith.constant 0 : i32
    %c0_i32_1 = arith.constant 0 : i32
    return %c0_i32, %c0_i32_0 : i32, i32
  }
  func.func @transform_18(%arg0: i32, %arg1: i32) -> (i32, i32, i32) {
    %c0_i32 = arith.constant 0 : i32
    %c0_i32_0 = arith.constant 0 : i32
    return %arg0, %arg1, %c0_i32 : i32, i32, i32
  }
}

</mosaic_0001>

<llo_original>
// kernel: tpu_custom_call.1
$region0: #{tpu_custom_call.1}
  #allocation0 [shape = 'u32[]', space=smem, size = 0x4, offset = 0x4, fixed_abs, tag = 'smem constant byte address 0x4 - core index']
  #allocation1 [shape = 'u32[72,128]{1,0:T(1,128)}', space=vmem, size = 0x9000, scoped, tag = 'internal scratch']
  #allocation2 [shape = 'bf16[8,32]{1,0:T(8,128)(2,1)}', space=vmem, size = 0x800, scoped, tag = 'scratch operand']
  #allocation3 [shape = 'bf16[8,32]{1,0:T(8,128)(2,1)}', space=vmem, size = 0x800, scoped, tag = 'scratch operand']
  %s0 = inlined_call_operand.vmem [shape: f32[2,8,32], index: 0, kind: input, shape index: {}]
  %s1 = inlined_call_operand.hbm [shape: bf16[2,8,32], index: 1, kind: input, shape index: {}]
  %s2 = inlined_call_operand.vmem [shape: bf16[32,32], index: 2, kind: input, shape index: {}]
  %s3 = inlined_call_operand.vmem [shape: f32[1,32], index: 3, kind: input, shape index: {}]
  %s4 = inlined_call_operand.vmem [shape: bf16[32,32], index: 4, kind: input, shape index: {}]
  %s5 = inlined_call_operand.vmem [shape: f32[1,32], index: 5, kind: input, shape index: {}]
  %s6 = inlined_call_operand.hbm [shape: bf16[32,32], index: 6, kind: input, shape index: {}]
  %s7 = inlined_call_operand.vmem [shape: f32[1,32], index: 7, kind: input, shape index: {}]
  %s8 = inlined_call_operand.hbm [shape: bf16[32,32], index: 8, kind: input, shape index: {}]
  %s9 = inlined_call_operand.vmem [shape: f32[1,32], index: 9, kind: input, shape index: {}]
  %s10 = inlined_call_operand.vmem [shape: f32[1,32], index: 10, kind: input, shape index: {}]
  %s11 = inlined_call_operand.vmem [shape: f32[1,32], index: 11, kind: input, shape index: {}]
  %s12 = inlined_call_operand.hbm [shape: bf16[32,64], index: 12, kind: input, shape index: {}]
  %s13 = inlined_call_operand.vmem [shape: f32[1,64], index: 13, kind: input, shape index: {}]
  %s14 = inlined_call_operand.vmem [shape: bf16[64,32], index: 14, kind: input, shape index: {}]
  %s15 = inlined_call_operand.vmem [shape: f32[1,32], index: 15, kind: input, shape index: {}]
  %s16 = inlined_call_operand.vmem [shape: f32[1,32], index: 16, kind: input, shape index: {}]
  %s17 = inlined_call_operand.vmem [shape: f32[1,32], index: 17, kind: input, shape index: {}]
  %s18 = inlined_call_operand.hbm [shape: f32[2,8,32], index: 18, kind: output, shape index: {}]
  %s19 = sld [smem:[#allocation0]]
  $region125: #{tpu_custom_call.1} parent=0
    _
  %s21 = ssub.s32 1, %s19
  %s22 = scalar_select 0, %s21, %s19
  $region1: #{tpu_custom_call.1} parent=0
    #allocation4 [shape = 'u8[4096]{0}', space=vmem, size = 0x1000, scoped, tag = 'input window, operand 1']
    #allocation5 [shape = 's32[2]{0}', space=sflag, size = 0x8, scoped, tag = 'scoped memory for tpu_custom_call.1']
    #allocation6 [shape = 's32[2]{0}', space=sflag, size = 0x8, scoped, tag = 'scoped memory for tpu_custom_call.1']
    #allocation7 [shape = 'u8[8192]{0}', space=vmem, size = 0x2000, scoped, tag = 'input window, operand 6, single buffered']
    #allocation8 [shape = 's32[1]{0}', space=sflag, size = 0x4, scoped, tag = 'scoped memory for tpu_custom_call.1']
    #allocation9 [shape = 'u8[8192]{0}', space=vmem, size = 0x2000, scoped, tag = 'input window, operand 8, single buffered']
    #allocation10 [shape = 'u8[8192]{0}', space=vmem, size = 0x2000, scoped, tag = 'input window, operand 12, single buffered']
    #allocation11 [shape = 's32[1]{0}', space=sflag, size = 0x4, scoped, tag = 'scoped memory for tpu_custom_call.1']
    #allocation12 [shape = 'u8[8192]{0}', space=vmem, size = 0x2000, scoped, tag = 'output window, operand 0']
    %23 = vsyncpa [#allocation5], 0
    %s24 = scalar_lea.sflag [#allocation5], 1
    %25 = vsyncpa %s24, 0
    %26 = vsyncpa [#allocation8], 0
    %27 = vsyncpa [#allocation11], 0
    %28 = vsyncpa [#allocation6], 0
    %s29 = scalar_lea.sflag [#allocation6], 1
    %30 = vsyncpa %s29, 0
    loop: start=0, step=1, limit=4
    $region2: #{tpu_custom_call.1} parent=1 // loop_pre_header
      _
    $region3: #{tpu_custom_call.1} parent=1 // loop_header
      %s32 = sphi 0, %s36
      %p33 = scmp.ge.s32.totalorder %s32, 4
      %s39 = sphi 0, %s51
      %s40 = sphi 0, %s47
      %s41 = sphi 0, %s39
      %s42 = sphi 0, %s40
      %s43 = sphi 0, %s41
      %s44 = sphi 0, %s42
      %s56 = sphi 0, %s58
      %s59 = sphi 0, %s56
      %s60 = sphi 0, %s59
      %s76 = sphi 0, %s60
      %s82 = sphi 0, %s84
      %s85 = sphi 0, %s82
      %s86 = sphi 0, %s85
      %s102 = sphi 0, %s86
      %s106 = sphi 0, %s106
      %s108 = sphi 0, %s106
      %s109 = sphi 0, %s108
      %s123 = sphi 0, %s109
      %s127 = sphi 0, %s127
      %s129 = sphi 0, %s127
      %s130 = sphi 0, %s129
      %s144 = sphi 0, %s130
      %s148 = sphi 0, %s148
      %s150 = sphi 0, %s148
      %s151 = sphi 0, %s150
      %s165 = sphi 0, %s151
      %s169 = sphi 0, %s169
      %s171 = sphi 0, %s169
      %s172 = sphi 0, %s171
      %s186 = sphi 0, %s172
      %s190 = sphi 0, %s190
      %s192 = sphi 0, %s190
      %s193 = sphi 0, %s192
      %s207 = sphi 0, %s193
      %s211 = sphi 0, %s211
      %s213 = sphi 0, %s211
      %s214 = sphi 0, %s213
      %s228 = sphi 0, %s214
      %s232 = sphi 0, %s232
      %s234 = sphi 0, %s232
      %s235 = sphi 0, %s234
      %s249 = sphi 0, %s235
      %s253 = sphi 0, %s253
      %s255 = sphi 0, %s253
      %s256 = sphi 0, %s255
      %s270 = sphi 0, %s256
      %s274 = sphi 0, %s274
      %s276 = sphi 0, %s274
      %s277 = sphi 0, %s276
      %s291 = sphi 0, %s277
      %s295 = sphi 0, %s295
      %s297 = sphi 0, %s295
      %s298 = sphi 0, %s297
      %s312 = sphi 0, %s298
      %s316 = sphi 0, %s316
      %s318 = sphi 0, %s316
      %s319 = sphi 0, %s318
      %s333 = sphi 0, %s319
      %s337 = sphi 0, %s337
      %s339 = sphi 0, %s337
      %s340 = sphi 0, %s339
      %s354 = sphi 0, %s340
      %s358 = sphi 0, %s358
      %s360 = sphi 0, %s358
      %s361 = sphi 0, %s360
      %s375 = sphi 0, %s361
      %s379 = sphi 0, %s379
      %s381 = sphi 0, %s379
      %s382 = sphi 0, %s381
      %s396 = sphi 0, %s382
      %s400 = sphi 0, %s400
      %s402 = sphi 0, %s400
      %s403 = sphi 0, %s402
      %s417 = sphi 0, %s403
      %s421 = sphi 0, %s421
      %s423 = sphi 0, %s421
      %s424 = sphi 0, %s423
      %s438 = sphi 0, %s424
      %s446 = sphi 0, %s448
      %s449 = sphi 0, %s446
      %s450 = sphi 0, %s449
      %s466 = sphi 0, %s450
    $region4: #{tpu_custom_call.1} parent=1 // loop_header_branch
      %35 = sbr.rel (%p33) target = $region8
    $region5: #{tpu_custom_call.1} parent=1 // loop_body
      %s37 = ssub.s32 %s32, 1
      %s38 = ssub.s32 %s32, 2
      %s45 = sadd.s32 1, %s40
      %p46 = scmp.ge.s32.totalorder %s45, 1
      %s47 = scalar_select %p46, 0, %s45
      %s48 = sadd.s32 1, %s39
      %s49 = scalar_select %p46, %s48, %s39
      %p50 = scmp.ge.s32.totalorder %s49, 2
      %s51 = scalar_select %p50, 0, %s49
      %s52 = ssub.s32 %s39, %s51
      %s53 = ssub.s32 %s40, %s47
      %s54 = sor.u32 %s52, %s53
      %p55 = scmp.eq.s32.totalorder %s54, 0
      %s57 = sadd.s32 %s56, 1
      %s58 = scalar_select %p55, %s56, %s57
      %p61 = pneg %p55
      %p62 = scmp.eq.s32.totalorder %s32, 1
      %p63 = por %p61, %p62
      %p64 = scmp.ne.s32.totalorder %s56, %s59
      %p65 = scmp.eq.s32.totalorder %s32, 0
      %p66 = por %p64, %p65
      %p67 = scmp.ne.s32.totalorder %s56, %s59
      %p68 = scmp.eq.s32.totalorder %s37, 1
      %p69 = por %p67, %p68
      %p70 = scmp.ne.s32.totalorder %s59, %s60
      %p71 = scmp.eq.s32.totalorder %s37, 0
      %p72 = por %p70, %p71
      %p73 = scmp.ne.s32.totalorder %s59, %s60
      %p74 = scmp.eq.s32.totalorder %s38, 1
      %p75 = por %p73, %p74
      %p77 = scmp.ne.s32.totalorder %s60, %s76
      %p78 = scmp.eq.s32.totalorder %s38, 0
      %p79 = por %p77, %p78
      %s80 = ssub.s32 %s39, %s51
      %p81 = scmp.eq.s32.totalorder %s80, 0
      %s83 = sadd.s32 %s82, 1
      %s84 = scalar_select %p81, %s82, %s83
      %p87 = pneg %p81
      %p88 = scmp.eq.s32.totalorder %s32, 1
      %p89 = por %p87, %p88
      %p90 = scmp.ne.s32.totalorder %s82, %s85
      %p91 = scmp.eq.s32.totalorder %s32, 0
      %p92 = por %p90, %p91
      %p93 = scmp.ne.s32.totalorder %s82, %s85
      %p94 = scmp.eq.s32.totalorder %s37, 1
      %p95 = por %p93, %p94
      %p96 = scmp.ne.s32.totalorder %s85, %s86
      %p97 = scmp.eq.s32.totalorder %s37, 0
      %p98 = por %p96, %p97
      %p99 = scmp.ne.s32.totalorder %s85, %s86
      %p100 = scmp.eq.s32.totalorder %s38, 1
      %p101 = por %p99, %p100
      %p103 = scmp.ne.s32.totalorder %s86, %s102
      %p104 = scmp.eq.s32.totalorder %s38, 0
      %p105 = por %p103, %p104
      %s107 = sadd.s32 %s106, 1
      %p110 = scmp.eq.s32.totalorder %s32, 1
      %p111 = scmp.ne.s32.totalorder %s106, %s108
      %p112 = scmp.eq.s32.totalorder %s32, 0
      %p113 = por %p111, %p112
      %p114 = scmp.ne.s32.totalorder %s106, %s108
      %p115 = scmp.eq.s32.totalorder %s37, 1
      %p116 = por %p114, %p115
      %p117 = scmp.ne.s32.totalorder %s108, %s109
      %p118 = scmp.eq.s32.totalorder %s37, 0
      %p119 = por %p117, %p118
      %p120 = scmp.ne.s32.totalorder %s108, %s109
      %p121 = scmp.eq.s32.totalorder %s38, 1
      %p122 = por %p120, %p121
      %p124 = scmp.ne.s32.totalorder %s109, %s123
      %p125 = scmp.eq.s32.totalorder %s38, 0
      %p126 = por %p124, %p125
      %s128 = sadd.s32 %s127, 1
      %p131 = scmp.eq.s32.totalorder %s32, 1
      %p132 = scmp.ne.s32.totalorder %s127, %s129
      %p133 = scmp.eq.s32.totalorder %s32, 0
      %p134 = por %p132, %p133
      %p135 = scmp.ne.s32.totalorder %s127, %s129
      %p136 = scmp.eq.s32.totalorder %s37, 1
      %p137 = por %p135, %p136
      %p138 = scmp.ne.s32.totalorder %s129, %s130
      %p139 = scmp.eq.s32.totalorder %s37, 0
      %p140 = por %p138, %p139
      %p141 = scmp.ne.s32.totalorder %s129, %s130
      %p142 = scmp.eq.s32.totalorder %s38, 1
      %p143 = por %p141, %p142
      %p145 = scmp.ne.s32.totalorder %s130, %s144
      %p146 = scmp.eq.s32.totalorder %s38, 0
      %p147 = por %p145, %p146
      %s149 = sadd.s32 %s148, 1
      %p152 = scmp.eq.s32.totalorder %s32, 1
      %p153 = scmp.ne.s32.totalorder %s148, %s150
      %p154 = scmp.eq.s32.totalorder %s32, 0
      %p155 = por %p153, %p154
      %p156 = scmp.ne.s32.totalorder %s148, %s150
      %p157 = scmp.eq.s32.totalorder %s37, 1
      %p158 = por %p156, %p157
      %p159 = scmp.ne.s32.totalorder %s150, %s151
      %p160 = scmp.eq.s32.totalorder %s37, 0
      %p161 = por %p159, %p160
      %p162 = scmp.ne.s32.totalorder %s150, %s151
      %p163 = scmp.eq.s32.totalorder %s38, 1
      %p164 = por %p162, %p163
      %p166 = scmp.ne.s32.totalorder %s151, %s165
      %p167 = scmp.eq.s32.totalorder %s38, 0
      %p168 = por %p166, %p167
      %s170 = sadd.s32 %s169, 1
      %p173 = scmp.eq.s32.totalorder %s32, 1
      %p174 = scmp.ne.s32.totalorder %s169, %s171
      %p175 = scmp.eq.s32.totalorder %s32, 0
      %p176 = por %p174, %p175
      %p177 = scmp.ne.s32.totalorder %s169, %s171
      %p178 = scmp.eq.s32.totalorder %s37, 1
      %p179 = por %p177, %p178
      %p180 = scmp.ne.s32.totalorder %s171, %s172
      %p181 = scmp.eq.s32.totalorder %s37, 0
      %p182 = por %p180, %p181
      %p183 = scmp.ne.s32.totalorder %s171, %s172
      %p184 = scmp.eq.s32.totalorder %s38, 1
      %p185 = por %p183, %p184
      %p187 = scmp.ne.s32.totalorder %s172, %s186
      %p188 = scmp.eq.s32.totalorder %s38, 0
      %p189 = por %p187, %p188
      %s191 = sadd.s32 %s190, 1
      %p194 = scmp.eq.s32.totalorder %s32, 1
      %p195 = scmp.ne.s32.totalorder %s190, %s192
      %p196 = scmp.eq.s32.totalorder %s32, 0
      %p197 = por %p195, %p196
      %p198 = scmp.ne.s32.totalorder %s190, %s192
      %p199 = scmp.eq.s32.totalorder %s37, 1
      %p200 = por %p198, %p199
      %p201 = scmp.ne.s32.totalorder %s192, %s193
      %p202 = scmp.eq.s32.totalorder %s37, 0
      %p203 = por %p201, %p202
      %p204 = scmp.ne.s32.totalorder %s192, %s193
      %p205 = scmp.eq.s32.totalorder %s38, 1
      %p206 = por %p204, %p205
      %p208 = scmp.ne.s32.totalorder %s193, %s207
      %p209 = scmp.eq.s32.totalorder %s38, 0
      %p210 = por %p208, %p209
      %s212 = sadd.s32 %s211, 1
      %p215 = scmp.eq.s32.totalorder %s32, 1
      %p216 = scmp.ne.s32.totalorder %s211, %s213
      %p217 = scmp.eq.s32.totalorder %s32, 0
      %p218 = por %p216, %p217
      %p219 = scmp.ne.s32.totalorder %s211, %s213
      %p220 = scmp.eq.s32.totalorder %s37, 1
      %p221 = por %p219, %p220
      %p222 = scmp.ne.s32.totalorder %s213, %s214
      %p223 = scmp.eq.s32.totalorder %s37, 0
      %p224 = por %p222, %p223
      %p225 = scmp.ne.s32.totalorder %s213, %s214
      %p226 = scmp.eq.s32.totalorder %s38, 1
      %p227 = por %p225, %p226
      %p229 = scmp.ne.s32.totalorder %s214, %s228
      %p230 = scmp.eq.s32.totalorder %s38, 0
      %p231 = por %p229, %p230
      %s233 = sadd.s32 %s232, 1
      %p236 = scmp.eq.s32.totalorder %s32, 1
      %p237 = scmp.ne.s32.totalorder %s232, %s234
      %p238 = scmp.eq.s32.totalorder %s32, 0
      %p239 = por %p237, %p238
      %p240 = scmp.ne.s32.totalorder %s232, %s234
      %p241 = scmp.eq.s32.totalorder %s37, 1
      %p242 = por %p240, %p241
      %p243 = scmp.ne.s32.totalorder %s234, %s235
      %p244 = scmp.eq.s32.totalorder %s37, 0
      %p245 = por %p243, %p244
      %p246 = scmp.ne.s32.totalorder %s234, %s235
      %p247 = scmp.eq.s32.totalorder %s38, 1
      %p248 = por %p246, %p247
      %p250 = scmp.ne.s32.totalorder %s235, %s249
      %p251 = scmp.eq.s32.totalorder %s38, 0
      %p252 = por %p250, %p251
      %s254 = sadd.s32 %s253, 1
      %p257 = scmp.eq.s32.totalorder %s32, 1
      %p258 = scmp.ne.s32.totalorder %s253, %s255
      %p259 = scmp.eq.s32.totalorder %s32, 0
      %p260 = por %p258, %p259
      %p261 = scmp.ne.s32.totalorder %s253, %s255
      %p262 = scmp.eq.s32.totalorder %s37, 1
      %p263 = por %p261, %p262
      %p264 = scmp.ne.s32.totalorder %s255, %s256
      %p265 = scmp.eq.s32.totalorder %s37, 0
      %p266 = por %p264, %p265
      %p267 = scmp.ne.s32.totalorder %s255, %s256
      %p268 = scmp.eq.s32.totalorder %s38, 1
      %p269 = por %p267, %p268
      %p271 = scmp.ne.s32.totalorder %s256, %s270
      %p272 = scmp.eq.s32.totalorder %s38, 0
      %p273 = por %p271, %p272
      %s275 = sadd.s32 %s274, 1
      %p278 = scmp.eq.s32.totalorder %s32, 1
      %p279 = scmp.ne.s32.totalorder %s274, %s276
      %p280 = scmp.eq.s32.totalorder %s32, 0
      %p281 = por %p279, %p280
      %p282 = scmp.ne.s32.totalorder %s274, %s276
      %p283 = scmp.eq.s32.totalorder %s37, 1
      %p284 = por %p282, %p283
      %p285 = scmp.ne.s32.totalorder %s276, %s277
      %p286 = scmp.eq.s32.totalorder %s37, 0
      %p287 = por %p285, %p286
      %p288 = scmp.ne.s32.totalorder %s276, %s277
      %p289 = scmp.eq.s32.totalorder %s38, 1
      %p290 = por %p288, %p289
      %p292 = scmp.ne.s32.totalorder %s277, %s291
      %p293 = scmp.eq.s32.totalorder %s38, 0
      %p294 = por %p292, %p293
      %s296 = sadd.s32 %s295, 1
      %p299 = scmp.eq.s32.totalorder %s32, 1
      %p300 = scmp.ne.s32.totalorder %s295, %s297
      %p301 = scmp.eq.s32.totalorder %s32, 0
      %p302 = por %p300, %p301
      %p303 = scmp.ne.s32.totalorder %s295, %s297
      %p304 = scmp.eq.s32.totalorder %s37, 1
      %p305 = por %p303, %p304
      %p306 = scmp.ne.s32.totalorder %s297, %s298
      %p307 = scmp.eq.s32.totalorder %s37, 0
      %p308 = por %p306, %p307
      %p309 = scmp.ne.s32.totalorder %s297, %s298
      %p310 = scmp.eq.s32.totalorder %s38, 1
      %p311 = por %p309, %p310
      %p313 = scmp.ne.s32.totalorder %s298, %s312
      %p314 = scmp.eq.s32.totalorder %s38, 0
      %p315 = por %p313, %p314
      %s317 = sadd.s32 %s316, 1
      %p320 = scmp.eq.s32.totalorder %s32, 1
      %p321 = scmp.ne.s32.totalorder %s316, %s318
      %p322 = scmp.eq.s32.totalorder %s32, 0
      %p323 = por %p321, %p322
      %p324 = scmp.ne.s32.totalorder %s316, %s318
      %p325 = scmp.eq.s32.totalorder %s37, 1
      %p326 = por %p324, %p325
      %p327 = scmp.ne.s32.totalorder %s318, %s319
      %p328 = scmp.eq.s32.totalorder %s37, 0
      %p329 = por %p327, %p328
      %p330 = scmp.ne.s32.totalorder %s318, %s319
      %p331 = scmp.eq.s32.totalorder %s38, 1
      %p332 = por %p330, %p331
      %p334 = scmp.ne.s32.totalorder %s319, %s333
      %p335 = scmp.eq.s32.totalorder %s38, 0
      %p336 = por %p334, %p335
      %s338 = sadd.s32 %s337, 1
      %p341 = scmp.eq.s32.totalorder %s32, 1
      %p342 = scmp.ne.s32.totalorder %s337, %s339
      %p343 = scmp.eq.s32.totalorder %s32, 0
      %p344 = por %p342, %p343
      %p345 = scmp.ne.s32.totalorder %s337, %s339
      %p346 = scmp.eq.s32.totalorder %s37, 1
      %p347 = por %p345, %p346
      %p348 = scmp.ne.s32.totalorder %s339, %s340
      %p349 = scmp.eq.s32.totalorder %s37, 0
      %p350 = por %p348, %p349
      %p351 = scmp.ne.s32.totalorder %s339, %s340
      %p352 = scmp.eq.s32.totalorder %s38, 1
      %p353 = por %p351, %p352
      %p355 = scmp.ne.s32.totalorder %s340, %s354
      %p356 = scmp.eq.s32.totalorder %s38, 0
      %p357 = por %p355, %p356
      %s359 = sadd.s32 %s358, 1
      %p362 = scmp.eq.s32.totalorder %s32, 1
      %p363 = scmp.ne.s32.totalorder %s358, %s360
      %p364 = scmp.eq.s32.totalorder %s32, 0
      %p365 = por %p363, %p364
      %p366 = scmp.ne.s32.totalorder %s358, %s360
      %p367 = scmp.eq.s32.totalorder %s37, 1
      %p368 = por %p366, %p367
      %p369 = scmp.ne.s32.totalorder %s360, %s361
      %p370 = scmp.eq.s32.totalorder %s37, 0
      %p371 = por %p369, %p370
      %p372 = scmp.ne.s32.totalorder %s360, %s361
      %p373 = scmp.eq.s32.totalorder %s38, 1
      %p374 = por %p372, %p373
      %p376 = scmp.ne.s32.totalorder %s361, %s375
      %p377 = scmp.eq.s32.totalorder %s38, 0
      %p378 = por %p376, %p377
      %s380 = sadd.s32 %s379, 1
      %p383 = scmp.eq.s32.totalorder %s32, 1
      %p384 = scmp.ne.s32.totalorder %s379, %s381
      %p385 = scmp.eq.s32.totalorder %s32, 0
      %p386 = por %p384, %p385
      %p387 = scmp.ne.s32.totalorder %s379, %s381
      %p388 = scmp.eq.s32.totalorder %s37, 1
      %p389 = por %p387, %p388
      %p390 = scmp.ne.s32.totalorder %s381, %s382
      %p391 = scmp.eq.s32.totalorder %s37, 0
      %p392 = por %p390, %p391
      %p393 = scmp.ne.s32.totalorder %s381, %s382
      %p394 = scmp.eq.s32.totalorder %s38, 1
      %p395 = por %p393, %p394
      %p397 = scmp.ne.s32.totalorder %s382, %s396
      %p398 = scmp.eq.s32.totalorder %s38, 0
      %p399 = por %p397, %p398
      %s401 = sadd.s32 %s400, 1
      %p404 = scmp.eq.s32.totalorder %s32, 1
      %p405 = scmp.ne.s32.totalorder %s400, %s402
      %p406 = scmp.eq.s32.totalorder %s32, 0
      %p407 = por %p405, %p406
      %p408 = scmp.ne.s32.totalorder %s400, %s402
      %p409 = scmp.eq.s32.totalorder %s37, 1
      %p410 = por %p408, %p409
      %p411 = scmp.ne.s32.totalorder %s402, %s403
      %p412 = scmp.eq.s32.totalorder %s37, 0
      %p413 = por %p411, %p412
      %p414 = scmp.ne.s32.totalorder %s402, %s403
      %p415 = scmp.eq.s32.totalorder %s38, 1
      %p416 = por %p414, %p415
      %p418 = scmp.ne.s32.totalorder %s403, %s417
      %p419 = scmp.eq.s32.totalorder %s38, 0
      %p420 = por %p418, %p419
      %s422 = sadd.s32 %s421, 1
      %p425 = scmp.eq.s32.totalorder %s32, 1
      %p426 = scmp.ne.s32.totalorder %s421, %s423
      %p427 = scmp.eq.s32.totalorder %s32, 0
      %p428 = por %p426, %p427
      %p429 = scmp.ne.s32.totalorder %s421, %s423
      %p430 = scmp.eq.s32.totalorder %s37, 1
      %p431 = por %p429, %p430
      %p432 = scmp.ne.s32.totalorder %s423, %s424
      %p433 = scmp.eq.s32.totalorder %s37, 0
      %p434 = por %p432, %p433
      %p435 = scmp.ne.s32.totalorder %s423, %s424
      %p436 = scmp.eq.s32.totalorder %s38, 1
      %p437 = por %p435, %p436
      %p439 = scmp.ne.s32.totalorder %s424, %s438
      %p440 = scmp.eq.s32.totalorder %s38, 0
      %p441 = por %p439, %p440
      %s442 = ssub.s32 %s39, %s51
      %s443 = ssub.s32 %s40, %s47
      %s444 = sor.u32 %s442, %s443
      %p445 = scmp.eq.s32.totalorder %s444, 0
      %s447 = sadd.s32 %s446, 1
      %s448 = scalar_select %p445, %s446, %s447
      %p451 = pneg %p445
      %p452 = scmp.eq.s32.totalorder %s32, 1
      %p453 = por %p451, %p452
      %p454 = scmp.ne.s32.totalorder %s446, %s449
      %p455 = scmp.eq.s32.totalorder %s32, 0
      %p456 = por %p454, %p455
      %p457 = scmp.ne.s32.totalorder %s446, %s449
      %p458 = scmp.eq.s32.totalorder %s37, 1
      %p459 = por %p457, %p458
      %p460 = scmp.ne.s32.totalorder %s449, %s450
      %p461 = scmp.eq.s32.totalorder %s37, 0
      %p462 = por %p460, %p461
      %p463 = scmp.ne.s32.totalorder %s449, %s450
      %p464 = scmp.eq.s32.totalorder %s38, 1
      %p465 = por %p463, %p464
      %p467 = scmp.ne.s32.totalorder %s450, %s466
      %p468 = scmp.eq.s32.totalorder %s38, 0
      %p469 = por %p467, %p468
      %p470 = scmp.le.s32.totalorder 1, %s32
      %p471 = scmp.lt.s32.totalorder %s32, 3
      %p472 = pnand %p470, %p471
      %p473 = pneg %p472
      // Predicated region
      $region9: #{tpu_custom_call.1} parent=5 // pred_check
        _
      $region10: #{tpu_custom_call.1} parent=5 // pred_check_branch
        %475 = sbr.rel (%p472) target = $region12
      $region11: #{tpu_custom_call.1} parent=5 // pred_region
        %s476 = ssub.s32 %s32, 1
        // Predicated region
        $region13: #{tpu_custom_call.1} parent=11 // pred_check
          %p477 = pneg %p119
        $region14: #{tpu_custom_call.1} parent=11 // pred_check_branch
          %479 = sbr.rel (%p477) target = $region16
        $region15: #{tpu_custom_call.1} parent=11 // pred_region
          _
        $region16: #{tpu_custom_call.1} parent=11 // pred_fallthru
          _
        // Predicated region
        $region17: #{tpu_custom_call.1} parent=11 // pred_check
          %p480 = pneg %p140
        $region18: #{tpu_custom_call.1} parent=11 // pred_check_branch
          %482 = sbr.rel (%p480) target = $region20
        $region19: #{tpu_custom_call.1} parent=11 // pred_region
          _
        $region20: #{tpu_custom_call.1} parent=11 // pred_fallthru
          _
        // Predicated region
        $region21: #{tpu_custom_call.1} parent=11 // pred_check
          %p483 = pneg %p161
        $region22: #{tpu_custom_call.1} parent=11 // pred_check_branch
          %485 = sbr.rel (%p483) target = $region24
        $region23: #{tpu_custom_call.1} parent=11 // pred_region
          _
        $region24: #{tpu_custom_call.1} parent=11 // pred_fallthru
          _
        // Predicated region
        $region25: #{tpu_custom_call.1} parent=11 // pred_check
          %p486 = pneg %p182
        $region26: #{tpu_custom_call.1} parent=11 // pred_check_branch
          %488 = sbr.rel (%p486) target = $region28
        $region27: #{tpu_custom_call.1} parent=11 // pred_region
          _
        $region28: #{tpu_custom_call.1} parent=11 // pred_fallthru
          _
        // Predicated region
        $region29: #{tpu_custom_call.1} parent=11 // pred_check
          %p489 = pneg %p203
        $region30: #{tpu_custom_call.1} parent=11 // pred_check_branch
          %491 = sbr.rel (%p489) target = $region32
        $region31: #{tpu_custom_call.1} parent=11 // pred_region
          %493 = vsyncadd [#allocation8], 0
          %s494 = sshll.u32 %s6, 4
          %s495 = int_to_ptr.hbm [resolvable:$true] %s494
          %s496 = sshll.u32 [#allocation7], 4
          %s497 = int_to_ptr.vmem [resolvable:$true] %s496
          %502 = dma.hbm_to_vmem [thread:$0]  %s495, 256, %s497, [#allocation8], 64, 64, 4
        $region32: #{tpu_custom_call.1} parent=11 // pred_fallthru
          _
        // Predicated region
        $region33: #{tpu_custom_call.1} parent=11 // pred_check
          %p503 = pneg %p224
        $region34: #{tpu_custom_call.1} parent=11 // pred_check_branch
          %505 = sbr.rel (%p503) target = $region36
        $region35: #{tpu_custom_call.1} parent=11 // pred_region
          _
        $region36: #{tpu_custom_call.1} parent=11 // pred_fallthru
          _
        // Predicated region
        $region37: #{tpu_custom_call.1} parent=11 // pred_check
          %p506 = pneg %p245
        $region38: #{tpu_custom_call.1} parent=11 // pred_check_branch
          %508 = sbr.rel (%p506) target = $region40
        $region39: #{tpu_custom_call.1} parent=11 // pred_region
          %510 = vsyncadd [#allocation8], 0
          %s511 = sshll.u32 %s8, 4
          %s512 = int_to_ptr.hbm [resolvable:$true] %s511
          %s513 = sshll.u32 [#allocation9], 4
          %s514 = int_to_ptr.vmem [resolvable:$true] %s513
          %519 = dma.hbm_to_vmem [thread:$0]  %s512, 256, %s514, [#allocation8], 64, 64, 4
        $region40: #{tpu_custom_call.1} parent=11 // pred_fallthru
          _
        // Predicated region
        $region41: #{tpu_custom_call.1} parent=11 // pred_check
          %p520 = pneg %p266
        $region42: #{tpu_custom_call.1} parent=11 // pred_check_branch
          %522 = sbr.rel (%p520) target = $region44
        $region43: #{tpu_custom_call.1} parent=11 // pred_region
          _
        $region44: #{tpu_custom_call.1} parent=11 // pred_fallthru
          _
        // Predicated region
        $region45: #{tpu_custom_call.1} parent=11 // pred_check
          %p523 = pneg %p287
        $region46: #{tpu_custom_call.1} parent=11 // pred_check_branch
          %525 = sbr.rel (%p523) target = $region48
        $region47: #{tpu_custom_call.1} parent=11 // pred_region
          _
        $region48: #{tpu_custom_call.1} parent=11 // pred_fallthru
          _
        // Predicated region
        $region49: #{tpu_custom_call.1} parent=11 // pred_check
          %p526 = pneg %p308
        $region50: #{tpu_custom_call.1} parent=11 // pred_check_branch
          %528 = sbr.rel (%p526) target = $region52
        $region51: #{tpu_custom_call.1} parent=11 // pred_region
          _
        $region52: #{tpu_custom_call.1} parent=11 // pred_fallthru
          _
        // Predicated region
        $region53: #{tpu_custom_call.1} parent=11 // pred_check
          %p529 = pneg %p329
        $region54: #{tpu_custom_call.1} parent=11 // pred_check_branch
          %531 = sbr.rel (%p529) target = $region56
        $region55: #{tpu_custom_call.1} parent=11 // pred_region
          %533 = vsyncadd [#allocation11], 0
          %s534 = sshll.u32 %s12, 4
          %s535 = int_to_ptr.hbm [resolvable:$true] %s534
          %s536 = sshll.u32 [#allocation10], 4
          %s537 = int_to_ptr.vmem [resolvable:$true] %s536
          %542 = dma.hbm_to_vmem [thread:$0]  %s535, 256, %s537, [#allocation11], 64, 64, 4
        $region56: #{tpu_custom_call.1} parent=11 // pred_fallthru
          _
        // Predicated region
        $region57: #{tpu_custom_call.1} parent=11 // pred_check
          %p543 = pneg %p350
        $region58: #{tpu_custom_call.1} parent=11 // pred_check_branch
          %545 = sbr.rel (%p543) target = $region60
        $region59: #{tpu_custom_call.1} parent=11 // pred_region
          _
        $region60: #{tpu_custom_call.1} parent=11 // pred_fallthru
          _
        // Predicated region
        $region61: #{tpu_custom_call.1} parent=11 // pred_check
          %p546 = pneg %p371
        $region62: #{tpu_custom_call.1} parent=11 // pred_check_branch
          %548 = sbr.rel (%p546) target = $region64
        $region63: #{tpu_custom_call.1} parent=11 // pred_region
          _
        $region64: #{tpu_custom_call.1} parent=11 // pred_fallthru
          _
        // Predicated region
        $region65: #{tpu_custom_call.1} parent=11 // pred_check
          %p549 = pneg %p392
        $region66: #{tpu_custom_call.1} parent=11 // pred_check_branch
          %551 = sbr.rel (%p549) target = $region68
        $region67: #{tpu_custom_call.1} parent=11 // pred_region
          _
        $region68: #{tpu_custom_call.1} parent=11 // pred_fallthru
          _
        // Predicated region
        $region69: #{tpu_custom_call.1} parent=11 // pred_check
          %p552 = pneg %p413
        $region70: #{tpu_custom_call.1} parent=11 // pred_check_branch
          %554 = sbr.rel (%p552) target = $region72
        $region71: #{tpu_custom_call.1} parent=11 // pred_region
          _
        $region72: #{tpu_custom_call.1} parent=11 // pred_fallthru
          _
        // Predicated region
        $region73: #{tpu_custom_call.1} parent=11 // pred_check
          %p555 = pneg %p434
        $region74: #{tpu_custom_call.1} parent=11 // pred_check_branch
          %557 = sbr.rel (%p555) target = $region76
        $region75: #{tpu_custom_call.1} parent=11 // pred_region
          _
        $region76: #{tpu_custom_call.1} parent=11 // pred_fallthru
          _
      $region12: #{tpu_custom_call.1} parent=5 // pred_fallthru
        _
      %p558 = scmp.lt.s32.totalorder %s32, 2
      // Predicated region
      $region77: #{tpu_custom_call.1} parent=5 // pred_check
        %p559 = pneg %p558
      $region78: #{tpu_custom_call.1} parent=5 // pred_check_branch
        %561 = sbr.rel (%p559) target = $region80
      $region79: #{tpu_custom_call.1} parent=5 // pred_region
        // Predicated region
        $region81: #{tpu_custom_call.1} parent=79 // pred_check
          %p562 = pneg %p66
        $region82: #{tpu_custom_call.1} parent=79 // pred_check_branch
          %564 = sbr.rel (%p562) target = $region84
        $region83: #{tpu_custom_call.1} parent=79 // pred_region
          %p565 = scmp.lt.s32.totalorder %s39, 1
          %s566 = scalar_select %p565, %s39, 1
          %p567 = scmp.lt.s32.totalorder %s40, 0
          %s568 = scalar_select %p567, %s40, 0
          %s569 = sadd.s32 %s568, %s566
          %s570 = smul.addr %s569, 8
          %s571 = scalar_lea.vmem %s0, %s570
        $region84: #{tpu_custom_call.1} parent=79 // pred_fallthru
          _
        // Predicated region
        $region85: #{tpu_custom_call.1} parent=79 // pred_check
          %p572 = pneg %p92
        $region86: #{tpu_custom_call.1} parent=79 // pred_check_branch
          %574 = sbr.rel (%p572) target = $region88
        $region87: #{tpu_custom_call.1} parent=79 // pred_region
          %s575 = sand.u32 %s82, 1
          %s576 = scalar_lea.sflag [#allocation5], %s575
          %s577 = sand.u32 %s82, 1
          %s578 = smul.addr %s577, 4
          %s579 = scalar_lea.vmem [#allocation4], %s578
          %581 = vsyncadd %s576, 0
          %s582 = smul.addr %s39, 4
          %s583 = scalar_lea.hbm %s1, %s582
          %s585 = sshll.u32 %s583, 4
          %s586 = int_to_ptr.hbm [resolvable:$true] %s585
          %s587 = sshll.u32 %s579, 4
          %s588 = int_to_ptr.vmem [resolvable:$true] %s587
          %590 = dma.hbm_to_vmem [thread:$0]  %s586, 64, %s588, %s576
        $region88: #{tpu_custom_call.1} parent=79 // pred_fallthru
          _
      $region80: #{tpu_custom_call.1} parent=5 // pred_fallthru
        _
      %p591 = scmp.le.s32.totalorder 1, %s32
      %p592 = scmp.lt.s32.totalorder %s32, 3
      %p593 = pnand %p591, %p592
      %p594 = pneg %p593
      // Predicated region
      $region89: #{tpu_custom_call.1} parent=5 // pred_check
        _
      $region90: #{tpu_custom_call.1} parent=5 // pred_check_branch
        %596 = sbr.rel (%p593) target = $region92
      $region91: #{tpu_custom_call.1} parent=5 // pred_region
        %s597 = ssub.s32 %s32, 1
        %s598 = sand.u32 %s85, 1
        %s599 = scalar_lea.sflag [#allocation5], %s598
        %s600 = sand.u32 %s85, 1
        %s601 = smul.addr %s600, 4
        %s602 = scalar_lea.vmem [#allocation4], %s601
        // Predicated region
        $region93: #{tpu_custom_call.1} parent=91 // pred_check
          %p603 = pneg %p98
        $region94: #{tpu_custom_call.1} parent=91 // pred_check_branch
          %605 = sbr.rel (%p603) target = $region96
        $region95: #{tpu_custom_call.1} parent=91 // pred_region
          %607 = dma.done %s599, 64
        $region96: #{tpu_custom_call.1} parent=91 // pred_fallthru
          _
        // Predicated region
        $region97: #{tpu_custom_call.1} parent=91 // pred_check
          %p608 = pneg %p203
        $region98: #{tpu_custom_call.1} parent=91 // pred_check_branch
          %610 = sbr.rel (%p608) target = $region100
        $region99: #{tpu_custom_call.1} parent=91 // pred_region
          %612 = dma.done [#allocation8], 256
        $region100: #{tpu_custom_call.1} parent=91 // pred_fallthru
          _
        // Predicated region
        $region101: #{tpu_custom_call.1} parent=91 // pred_check
          %p613 = pneg %p245
        $region102: #{tpu_custom_call.1} parent=91 // pred_check_branch
          %615 = sbr.rel (%p613) target = $region104
        $region103: #{tpu_custom_call.1} parent=91 // pred_region
          %617 = dma.done [#allocation8], 256
        $region104: #{tpu_custom_call.1} parent=91 // pred_fallthru
          _
        // Predicated region
        $region105: #{tpu_custom_call.1} parent=91 // pred_check
          %p618 = pneg %p329
        $region106: #{tpu_custom_call.1} parent=91 // pred_check_branch
          %620 = sbr.rel (%p618) target = $region108
        $region107: #{tpu_custom_call.1} parent=91 // pred_region
          %622 = dma.done [#allocation11], 256
        $region108: #{tpu_custom_call.1} parent=91 // pred_fallthru
          _
        %p623 = scmp.lt.s32.totalorder %s41, 1
        %s624 = scalar_select %p623, %s41, 1
        %p625 = scmp.lt.s32.totalorder %s42, 0
        %s626 = scalar_select %p625, %s42, 0
        %s627 = sadd.s32 %s626, %s624
        %s628 = smul.addr %s627, 8
        %s629 = scalar_lea.vmem %s0, %s628
        %p630 = pneg %p72
        %p631 = pneg %p69
        %s632 = sand.u32 %s85, 1
        %s633 = scalar_lea.sflag [#allocation5], %s632
        %s634 = sand.u32 %s85, 1
        %s635 = smul.addr %s634, 4
        %s636 = scalar_lea.vmem [#allocation4], %s635
        %p637 = pneg %p98
        %p638 = pneg %p95
        %p639 = pneg %p119
        %p640 = pneg %p116
        %p641 = pneg %p140
        %p642 = pneg %p137
        %p643 = pneg %p161
        %p644 = pneg %p158
        %p645 = pneg %p182
        %p646 = pneg %p179
        %p647 = pneg %p203
        %p648 = pneg %p200
        %p649 = pneg %p224
        %p650 = pneg %p221
        %p651 = pneg %p245
        %p652 = pneg %p242
        %p653 = pneg %p266
        %p654 = pneg %p263
        %p655 = pneg %p287
        %p656 = pneg %p284
        %p657 = pneg %p308
        %p658 = pneg %p305
        %p659 = pneg %p329
        %p660 = pneg %p326
        %p661 = pneg %p350
        %p662 = pneg %p347
        %p663 = pneg %p371
        %p664 = pneg %p368
        %p665 = pneg %p392
        %p666 = pneg %p389
        %p667 = pneg %p413
        %p668 = pneg %p410
        %p669 = pneg %p434
        %p670 = pneg %p431
        %p671 = pneg %p462
        %p672 = pneg %p459
        %s673 = sand.u32 %s449, 1
        %s674 = scalar_lea.sflag [#allocation6], %s673
        %s675 = sand.u32 %s449, 1
        %s676 = smul.addr %s675, 8
        %s677 = scalar_lea.vmem [#allocation12], %s676
        %p678 = scmp.lt.s32.totalorder %s41, 1
        %s679 = scalar_select %p678, %s41, 1
        %p680 = scmp.lt.s32.totalorder %s42, 0
        %s681 = scalar_select %p680, %s42, 0
        %s682 = sadd.s32 %s681, %s679
        %s683 = smul.addr %s682, 8
        %s684 = scalar_lea.vmem %s0, %s683
        %v686 = vld [vmem:[%s684] sm:$0xff]
        %p687 = scmp.eq.s32.totalorder %s42, 0
        // Predicated region
        $region109: #{tpu_custom_call.1} parent=91 // pred_check
          %p688 = pneg %p687
        $region110: #{tpu_custom_call.1} parent=91 // pred_check_branch
          %690 = sbr.rel (%p688) target = $region112
        $region111: #{tpu_custom_call.1} parent=91 // pred_region
          %v691 = vld [vmem:[%s602] sm:$0xf]
          %v692 = vld [vmem:[%s4] sm:$0xf]
          %v693 = vld [vmem:[%s4 + $0x4] sm:$0xf]
          %v694 = vld [vmem:[%s4 + $0x8] sm:$0xf]
          %v695 = vld [vmem:[%s4 + $0xc] sm:$0xf]
          %v696 = vld [vmem:[%s5] sm:$0x1]
          %v698 = vperm.slane %v696, 0
          %v704 = vunpack.c.l.b16 %v692
          %v705 = vunpack.c.l.b16 %v693
          %v706 = vunpack.c.l.b16 %v694
          %v707 = vunpack.c.l.b16 %v695
          %v708 = vpack.c.b16 %v705, %v704
          %v709 = vpack.c.b16 %v707, %v706
          %vm712 = vcmask 261120
          %v714 = vsel %vm712, %v691, 0
          %716 = vmatpush.bf16.msra.mxu0 0
          %717 = vmatpush.bf16.msra.mxu0 0
          %718 = vmatpush.bf16.msra.mxu0 0
          %719 = vmatpush.bf16.msra.mxu0 0
          %720 = vmatpush.bf16.msra.mxu0 0
          %721 = vmatpush.bf16.msra.mxu0 0
          %722 = vmatpush.bf16.msra.mxu0 %v709
          %723 = vmatpush.bf16.msra.mxu0 %v708
          %724 = vmatmul.bf16.gmra.mxu0 %v714
          %v725 = vpop.f32.mrf.mxu0
          %v726 = vadd.f32 %v698, %v725
          %v727 = vpop.f32.mrf.mxu0
          %728 = vdwg.mxu0
          %v729 = vpack.c.bf16 %v726, %v726
          %vm730 = vcmask 257024
          %731 = vst.msk [vmem:[#allocation2] sm:$0xf] %vm730, %v729
          %v732 = vld [vmem:[#allocation7] sm:$0xf]
          %v733 = vld [vmem:[#allocation7 + $0x4] sm:$0xf]
          %v734 = vld [vmem:[#allocation7 + $0x8] sm:$0xf]
          %v735 = vld [vmem:[#allocation7 + $0xc] sm:$0xf]
          %v736 = vld [vmem:[%s7] sm:$0x1]
          %v738 = vperm.slane %v736, 0
          %v744 = vunpack.c.l.b16 %v732
          %v745 = vunpack.c.l.b16 %v733
          %v746 = vunpack.c.l.b16 %v734
          %v747 = vunpack.c.l.b16 %v735
          %v748 = vpack.c.b16 %v745, %v744
          %v749 = vpack.c.b16 %v747, %v746
          %752 = vmatpush.bf16.msra.mxu0 0
          %753 = vmatpush.bf16.msra.mxu0 0
          %754 = vmatpush.bf16.msra.mxu0 0
          %755 = vmatpush.bf16.msra.mxu0 0
          %756 = vmatpush.bf16.msra.mxu0 0
          %757 = vmatpush.bf16.msra.mxu0 0
          %758 = vmatpush.bf16.msra.mxu0 %v749
          %759 = vmatpush.bf16.msra.mxu0 %v748
          %760 = vmatmul.bf16.gmra.mxu0 %v714
          %v761 = vpop.f32.mrf.mxu0
          %v762 = vadd.f32 %v738, %v761
          %v763 = vpop.f32.mrf.mxu0
          %764 = vdwg.mxu0
          %v765 = vpack.c.bf16 %v762, %v762
          %766 = vst.msk [vmem:[#allocation3] sm:$0xf] %vm730, %v765
        $region112: #{tpu_custom_call.1} parent=91 // pred_fallthru
          _
        %v767 = vpack.c.bf16 %v686, %v686
        %v768 = vld [vmem:[%s2] sm:$0xf]
        %v769 = vld [vmem:[%s2 + $0x4] sm:$0xf]
        %v770 = vld [vmem:[%s2 + $0x8] sm:$0xf]
        %v771 = vld [vmem:[%s2 + $0xc] sm:$0xf]
        %v772 = vld [vmem:[%s3] sm:$0x1]
        %v774 = vperm.slane %v772, 0
        %v780 = vunpack.c.l.b16 %v768
        %v781 = vunpack.c.l.b16 %v769
        %v782 = vunpack.c.l.b16 %v770
        %v783 = vunpack.c.l.b16 %v771
        %v784 = vpack.c.b16 %v781, %v780
        %v785 = vpack.c.b16 %v783, %v782
        %vm788 = vcmask 261120
        %v790 = vsel %vm788, %v767, 0
        %792 = vmatpush.bf16.msra.mxu0 0
        %793 = vmatpush.bf16.msra.mxu0 0
        %794 = vmatpush.bf16.msra.mxu0 0
        %795 = vmatpush.bf16.msra.mxu0 0
        %796 = vmatpush.bf16.msra.mxu0 0
        %797 = vmatpush.bf16.msra.mxu0 0
        %798 = vmatpush.bf16.msra.mxu0 %v785
        %799 = vmatpush.bf16.msra.mxu0 %v784
        %800 = vmatmul.bf16.gmra.mxu0 %v790
        %v801 = vpop.f32.mrf.mxu0
        %v802 = vadd.f32 %v774, %v801
        %v803 = vpop.f32.mrf.mxu0
        %804 = vdwg.mxu0
        %v805 = vpack.c.bf16 %v802, %v802
        %v806 = vld [vmem:[#allocation2] sm:$0xf]
        %v807 = vld [vmem:[#allocation3] sm:$0xf]
        %vm808 = vcmask 64512
        %v810 = vsel %vm808, %v805, 0
        %v813 = vsel %vm808, %v806, 0
        %815 = vmatpush.bf16.xpose.msra.mxu0 0
        %816 = vmatpush.bf16.xpose.msra.mxu0 0
        %817 = vmatpush.bf16.xpose.msra.mxu0 0
        %818 = vmatpush.bf16.xpose.msra.mxu0 0
        %819 = vmatpush.bf16.xpose.msra.mxu0 0
        %820 = vmatpush.bf16.xpose.msra.mxu0 0
        %821 = vmatpush.bf16.xpose.msra.mxu0 0
        %822 = vmatpush.bf16.xpose.msra.mxu0 %v813
        %823 = vmatmul.bf16.gmra.mxu0 %v810
        %v824 = vpop.f32.mrf.mxu0
        %v825 = vadd.f32 0.0, %v824
        %v826 = vpop.f32.mrf.mxu0
        %827 = vdwg.mxu0
        %v828 = vsel %vm808, %v825, -inf
        %829 = vmax.xlane.f32.xlu0 %v828
        %v830 = vpop.xlane.xlu0 %829
        %v831 = vsub.f32 %v825, %v830
        %v832 = vmul.f32 %v831, 1.442695
        %v833 = vpow.pop %v832
        %v834 = vsel %vm808, %v833, 0.0
        %835 = vadd.xlane.f32.xlu0 %v834
        %v836 = vpop.xlane.xlu0 %835
        %v837 = vpack.c.bf16 %v833, %v833
        %v839 = vsel %vm808, %v837, 0
        %vm841 = vcmask 1043456
        %v843 = vsel %vm841, %v807, 0
        %845 = vmatpush.bf16.msra.mxu0 0
        %846 = vmatpush.bf16.msra.mxu0 0
        %847 = vmatpush.bf16.msra.mxu0 0
        %848 = vmatpush.bf16.msra.mxu0 0
        %849 = vmatpush.bf16.msra.mxu0 0
        %850 = vmatpush.bf16.msra.mxu0 0
        %851 = vmatpush.bf16.msra.mxu0 0
        %852 = vmatpush.bf16.msra.mxu0 %v843
        %853 = vmatmul.bf16.gmra.mxu0 %v839
        %v854 = vpop.f32.mrf.mxu0
        %v855 = vadd.f32 0.0, %v854
        %v856 = vpop.f32.mrf.mxu0
        %857 = vdwg.mxu0
        %v858 = vrcp.pop %v836
        %v859 = vmul.f32 %v836, %v858
        %v860 = vsub.f32 1.0, %v859
        %v861 = vmul.f32 %v858, %v860
        %v862 = vadd.f32 %v858, %v861
        %vm863 = vweird.f32 %v836
        %vm864 = vweird.f32 %v858
        %vm865 = vmor %vm863, %vm864
        %v866 = vsel %vm865, %v858, %v862
        %v867 = vand.u32 2147483647, %v836
        %vm868 = vcmp.eq.f32.partialorder %v867, 8.507059e+37
        %v869 = vand.u32 %v836, 2147483648
        %v870 = vor.u32 1.1754944e-38, %v869
        %v871 = vsel %vm868, %v870, %v866
        %v872 = vmul.f32 %v855, %v871
        %v874 = vunpack.c.l.b16 %v805
        %v875 = vpack.c.b16 %v874, %v874
        %876 = vrot.lane.b32.xlu0 %v875, 120
        %v877 = vpop.permute.xlu0 %876
        %v879 = vunpack.c.l.b16 %v806
        %v880 = vpack.c.b16 %v879, %v879
        %881 = vrot.lane.b32.xlu0 %v880, 120
        %v882 = vpop.permute.xlu0 %881
        %v884 = vsel %vm808, %v877, 0
        %v887 = vsel %vm808, %v882, 0
        %889 = vmatpush.bf16.xpose.msra.mxu0 0
        %890 = vmatpush.bf16.xpose.msra.mxu0 0
        %891 = vmatpush.bf16.xpose.msra.mxu0 0
        %892 = vmatpush.bf16.xpose.msra.mxu0 0
        %893 = vmatpush.bf16.xpose.msra.mxu0 0
        %894 = vmatpush.bf16.xpose.msra.mxu0 0
        %895 = vmatpush.bf16.xpose.msra.mxu0 0
        %896 = vmatpush.bf16.xpose.msra.mxu0 %v887
        %897 = vmatmul.bf16.gmra.mxu0 %v884
        %v898 = vpop.f32.mrf.mxu0
        %v899 = vadd.f32 0.0, %v898
        %v900 = vpop.f32.mrf.mxu0
        %901 = vdwg.mxu0
        %v902 = vsel %vm808, %v899, -inf
        %903 = vmax.xlane.f32.xlu0 %v902
        %v904 = vpop.xlane.xlu0 %903
        %v905 = vsub.f32 %v899, %v904
        %v906 = vmul.f32 %v905, 1.442695
        %v907 = vpow.pop %v906
        %v908 = vsel %vm808, %v907, 0.0
        %909 = vadd.xlane.f32.xlu0 %v908
        %v910 = vpop.xlane.xlu0 %909
        %v911 = vpack.c.bf16 %v907, %v907
        %v913 = vunpack.c.l.b16 %v807
        %v914 = vpack.c.b16 %v913, %v913
        %915 = vrot.lane.b32.xlu0 %v914, 120
        %v916 = vpop.permute.xlu0 %915
        %v918 = vsel %vm808, %v911, 0
        %v921 = vsel %vm841, %v916, 0
        %923 = vmatpush.bf16.msra.mxu0 0
        %924 = vmatpush.bf16.msra.mxu0 0
        %925 = vmatpush.bf16.msra.mxu0 0
        %926 = vmatpush.bf16.msra.mxu0 0
        %927 = vmatpush.bf16.msra.mxu0 0
        %928 = vmatpush.bf16.msra.mxu0 0
        %929 = vmatpush.bf16.msra.mxu0 0
        %930 = vmatpush.bf16.msra.mxu0 %v921
        %931 = vmatmul.bf16.gmra.mxu0 %v918
        %v932 = vpop.f32.mrf.mxu0
        %v933 = vadd.f32 0.0, %v932
        %v934 = vpop.f32.mrf.mxu0
        %935 = vdwg.mxu0
        %v936 = vrcp.pop %v910
        %v937 = vmul.f32 %v910, %v936
        %v938 = vsub.f32 1.0, %v937
        %v939 = vmul.f32 %v936, %v938
        %v940 = vadd.f32 %v936, %v939
        %vm941 = vweird.f32 %v910
        %vm942 = vweird.f32 %v936
        %vm943 = vmor %vm941, %vm942
        %v944 = vsel %vm943, %v936, %v940
        %v945 = vand.u32 2147483647, %v910
        %vm946 = vcmp.eq.f32.partialorder %v945, 8.507059e+37
        %v947 = vand.u32 %v910, 2147483648
        %v948 = vor.u32 1.1754944e-38, %v947
        %v949 = vsel %vm946, %v948, %v944
        %v950 = vmul.f32 %v933, %v949
        %951 = vrot.lane.b32.xlu0 %v875, 112
        %v952 = vpop.permute.xlu0 %951
        %953 = vrot.lane.b32.xlu0 %v880, 112
        %v954 = vpop.permute.xlu0 %953
        %v956 = vsel %vm808, %v952, 0
        %v959 = vsel %vm808, %v954, 0
        %961 = vmatpush.bf16.xpose.msra.mxu0 0
        %962 = vmatpush.bf16.xpose.msra.mxu0 0
        %963 = vmatpush.bf16.xpose.msra.mxu0 0
        %964 = vmatpush.bf16.xpose.msra.mxu0 0
        %965 = vmatpush.bf16.xpose.msra.mxu0 0
        %966 = vmatpush.bf16.xpose.msra.mxu0 0
        %967 = vmatpush.bf16.xpose.msra.mxu0 0
        %968 = vmatpush.bf16.xpose.msra.mxu0 %v959
        %969 = vmatmul.bf16.gmra.mxu0 %v956
        %v970 = vpop.f32.mrf.mxu0
        %v971 = vadd.f32 0.0, %v970
        %v972 = vpop.f32.mrf.mxu0
        %973 = vdwg.mxu0
        %v974 = vsel %vm808, %v971, -inf
        %975 = vmax.xlane.f32.xlu0 %v974
        %v976 = vpop.xlane.xlu0 %975
        %v977 = vsub.f32 %v971, %v976
        %v978 = vmul.f32 %v977, 1.442695
        %v979 = vpow.pop %v978
        %v980 = vsel %vm808, %v979, 0.0
        %981 = vadd.xlane.f32.xlu0 %v980
        %v982 = vpop.xlane.xlu0 %981
        %v983 = vpack.c.bf16 %v979, %v979
        %984 = vrot.lane.b32.xlu0 %v914, 112
        %v985 = vpop.permute.xlu0 %984
        %v987 = vsel %vm808, %v983, 0
        %v990 = vsel %vm841, %v985, 0
        %992 = vmatpush.bf16.msra.mxu0 0
        %993 = vmatpush.bf16.msra.mxu0 0
        %994 = vmatpush.bf16.msra.mxu0 0
        %995 = vmatpush.bf16.msra.mxu0 0
        %996 = vmatpush.bf16.msra.mxu0 0
        %997 = vmatpush.bf16.msra.mxu0 0
        %998 = vmatpush.bf16.msra.mxu0 0
        %999 = vmatpush.bf16.msra.mxu0 %v990
        %1000 = vmatmul.bf16.gmra.mxu0 %v987
        %v1001 = vpop.f32.mrf.mxu0
        %v1002 = vadd.f32 0.0, %v1001
        %v1003 = vpop.f32.mrf.mxu0
        %1004 = vdwg.mxu0
        %v1005 = vrcp.pop %v982
        %v1006 = vmul.f32 %v982, %v1005
        %v1007 = vsub.f32 1.0, %v1006
        %v1008 = vmul.f32 %v1005, %v1007
        %v1009 = vadd.f32 %v1005, %v1008
        %vm1010 = vweird.f32 %v982
        %vm1011 = vweird.f32 %v1005
        %vm1012 = vmor %vm1010, %vm1011
        %v1013 = vsel %vm1012, %v1005, %v1009
        %v1014 = vand.u32 2147483647, %v982
        %vm1015 = vcmp.eq.f32.partialorder %v1014, 8.507059e+37
        %v1016 = vand.u32 %v982, 2147483648
        %v1017 = vor.u32 1.1754944e-38, %v1016
        %v1018 = vsel %vm1015, %v1017, %v1013
        %v1019 = vmul.f32 %v1002, %v1018
        %1020 = vrot.lane.b32.xlu0 %v875, 104
        %v1021 = vpop.permute.xlu0 %1020
        %1022 = vrot.lane.b32.xlu0 %v880, 104
        %v1023 = vpop.permute.xlu0 %1022
        %v1025 = vsel %vm808, %v1021, 0
        %v1028 = vsel %vm808, %v1023, 0
        %1030 = vmatpush.bf16.xpose.msra.mxu0 0
        %1031 = vmatpush.bf16.xpose.msra.mxu0 0
        %1032 = vmatpush.bf16.xpose.msra.mxu0 0
        %1033 = vmatpush.bf16.xpose.msra.mxu0 0
        %1034 = vmatpush.bf16.xpose.msra.mxu0 0
        %1035 = vmatpush.bf16.xpose.msra.mxu0 0
        %1036 = vmatpush.bf16.xpose.msra.mxu0 0
        %1037 = vmatpush.bf16.xpose.msra.mxu0 %v1028
        %1038 = vmatmul.bf16.gmra.mxu0 %v1025
        %v1039 = vpop.f32.mrf.mxu0
        %v1040 = vadd.f32 0.0, %v1039
        %v1041 = vpop.f32.mrf.mxu0
        %1042 = vdwg.mxu0
        %v1043 = vsel %vm808, %v1040, -inf
        %1044 = vmax.xlane.f32.xlu0 %v1043
        %v1045 = vpop.xlane.xlu0 %1044
        %v1046 = vsub.f32 %v1040, %v1045
        %v1047 = vmul.f32 %v1046, 1.442695
        %v1048 = vpow.pop %v1047
        %v1049 = vsel %vm808, %v1048, 0.0
        %1050 = vadd.xlane.f32.xlu0 %v1049
        %v1051 = vpop.xlane.xlu0 %1050
        %v1052 = vpack.c.bf16 %v1048, %v1048
        %1053 = vrot.lane.b32.xlu0 %v914, 104
        %v1054 = vpop.permute.xlu0 %1053
        %v1056 = vsel %vm808, %v1052, 0
        %v1059 = vsel %vm841, %v1054, 0
        %1061 = vmatpush.bf16.msra.mxu0 0
        %1062 = vmatpush.bf16.msra.mxu0 0
        %1063 = vmatpush.bf16.msra.mxu0 0
        %1064 = vmatpush.bf16.msra.mxu0 0
        %1065 = vmatpush.bf16.msra.mxu0 0
        %1066 = vmatpush.bf16.msra.mxu0 0
        %1067 = vmatpush.bf16.msra.mxu0 0
        %1068 = vmatpush.bf16.msra.mxu0 %v1059
        %1069 = vmatmul.bf16.gmra.mxu0 %v1056
        %v1070 = vpop.f32.mrf.mxu0
        %v1071 = vadd.f32 0.0, %v1070
        %v1072 = vpop.f32.mrf.mxu0
        %1073 = vdwg.mxu0
        %v1074 = vrcp.pop %v1051
        %v1075 = vmul.f32 %v1051, %v1074
        %v1076 = vsub.f32 1.0, %v1075
        %v1077 = vmul.f32 %v1074, %v1076
        %v1078 = vadd.f32 %v1074, %v1077
        %vm1079 = vweird.f32 %v1051
        %vm1080 = vweird.f32 %v1074
        %vm1081 = vmor %vm1079, %vm1080
        %v1082 = vsel %vm1081, %v1074, %v1078
        %v1083 = vand.u32 2147483647, %v1051
        %vm1084 = vcmp.eq.f32.partialorder %v1083, 8.507059e+37
        %v1085 = vand.u32 %v1051, 2147483648
        %v1086 = vor.u32 1.1754944e-38, %v1085
        %v1087 = vsel %vm1084, %v1086, %v1082
        %v1088 = vmul.f32 %v1071, %v1087
        %1090 = vrot.lane.b32.xlu0 %v950, 8
        %v1091 = vpop.permute.xlu0 %1090
        %1094 = vrot.lane.b32.xlu0 %v1019, 16
        %v1095 = vpop.permute.xlu0 %1094
        %1098 = vrot.lane.b32.xlu0 %v1088, 24
        %v1099 = vpop.permute.xlu0 %1098
        %v1101 = vsel %vm808, %v872, %v1091
        %vm1102 = vcmask 130048
        %v1103 = vsel %vm1102, %v1101, %v1095
        %vm1104 = vcmask 195584
        %v1105 = vsel %vm1104, %v1103, %v1099
        %v1106 = vpack.c.bf16 %v1105, %v1105
        %v1107 = vld [vmem:[#allocation9] sm:$0xf]
        %v1108 = vld [vmem:[#allocation9 + $0x4] sm:$0xf]
        %v1109 = vld [vmem:[#allocation9 + $0x8] sm:$0xf]
        %v1110 = vld [vmem:[#allocation9 + $0xc] sm:$0xf]
        %v1111 = vld [vmem:[%s9] sm:$0x1]
        %v1113 = vperm.slane %v1111, 0
        %v1119 = vunpack.c.l.b16 %v1107
        %v1120 = vunpack.c.l.b16 %v1108
        %v1121 = vunpack.c.l.b16 %v1109
        %v1122 = vunpack.c.l.b16 %v1110
        %v1123 = vpack.c.b16 %v1120, %v1119
        %v1124 = vpack.c.b16 %v1122, %v1121
        %v1128 = vsel %vm788, %v1106, 0
        %1130 = vmatpush.bf16.msra.mxu0 0
        %1131 = vmatpush.bf16.msra.mxu0 0
        %1132 = vmatpush.bf16.msra.mxu0 0
        %1133 = vmatpush.bf16.msra.mxu0 0
        %1134 = vmatpush.bf16.msra.mxu0 0
        %1135 = vmatpush.bf16.msra.mxu0 0
        %1136 = vmatpush.bf16.msra.mxu0 %v1124
        %1137 = vmatpush.bf16.msra.mxu0 %v1123
        %1138 = vmatmul.bf16.gmra.mxu0 %v1128
        %v1139 = vpop.f32.mrf.mxu0
        %v1140 = vadd.f32 %v1113, %v1139
        %v1141 = vpop.f32.mrf.mxu0
        %1142 = vdwg.mxu0
        %v1143 = vadd.f32 %v686, %v1140
        %v1144 = vsel %vm788, %v1143, 0.0
        %1145 = vadd.xlane.f32.xlu0 %v1144
        %v1146 = vpop.xlane.xlu0 %1145
        %v1147 = vrcp.pop 32.0
        %v1148 = vmul.f32 32.0, %v1147
        %v1149 = vsub.f32 1.0, %v1148
        %v1150 = vmul.f32 %v1147, %v1149
        %v1151 = vadd.f32 %v1147, %v1150
        %vm1152 = vweird.f32 %v1147
        %v1153 = vsel %vm1152, %v1147, %v1151
        %v1154 = vmul.f32 %v1146, %v1153
        %v1155 = vsub.f32 %v1143, %v1154
        %v1156 = vmul.f32 %v1155, %v1155
        %v1157 = vsel %vm788, %v1156, 0.0
        %1158 = vadd.xlane.f32.xlu0 %v1157
        %v1159 = vpop.xlane.xlu0 %1158
        %v1160 = vmul.f32 %v1159, %v1153
        %v1161 = vadd.f32 %v1160, 1e-05
        %v1162 = vrsqrt.pop %v1161
        %v1163 = vmul.f32 %v1162, %v1161
        %v1164 = vmul.f32 %v1163, %v1162
        %v1165 = vmul.f32 0.5, %v1164
        %v1166 = vsub.f32 1.5, %v1165
        %v1167 = vmul.f32 %v1162, %v1166
        %vm1168 = vweird.f32 %v1161
        %vm1169 = vweird.f32 %v1162
        %vm1170 = vmor %vm1168, %vm1169
        %v1171 = vsel %vm1170, %v1162, %v1167
        %v1172 = vmul.f32 %v1155, %v1171
        %v1173 = vld [vmem:[%s10] sm:$0x1]
        %v1175 = vperm.slane %v1173, 0
        %v1177 = vmul.f32 %v1172, %v1175
        %v1178 = vld [vmem:[%s11] sm:$0x1]
        %v1180 = vperm.slane %v1178, 0
        %v1182 = vadd.f32 %v1177, %v1180
        %v1183 = vpack.c.bf16 %v1182, %v1182
        %v1184 = vld [vmem:[#allocation10] sm:$0xf]
        %v1185 = vld [vmem:[#allocation10 + $0x4] sm:$0xf]
        %v1186 = vld [vmem:[#allocation10 + $0x8] sm:$0xf]
        %v1187 = vld [vmem:[#allocation10 + $0xc] sm:$0xf]
        %v1188 = vld [vmem:[%s13] sm:$0x1]
        %v1190 = vperm.slane %v1188, 0
        %v1196 = vunpack.c.l.b16 %v1184
        %v1197 = vunpack.c.l.b16 %v1185
        %v1198 = vunpack.c.l.b16 %v1186
        %v1199 = vunpack.c.l.b16 %v1187
        %v1200 = vpack.c.b16 %v1197, %v1196
        %v1201 = vpack.c.b16 %v1199, %v1198
        %v1205 = vsel %vm788, %v1183, 0
        %1207 = vmatpush.bf16.msra.mxu0 0
        %1208 = vmatpush.bf16.msra.mxu0 0
        %1209 = vmatpush.bf16.msra.mxu0 0
        %1210 = vmatpush.bf16.msra.mxu0 0
        %1211 = vmatpush.bf16.msra.mxu0 0
        %1212 = vmatpush.bf16.msra.mxu0 0
        %1213 = vmatpush.bf16.msra.mxu0 %v1201
        %1214 = vmatpush.bf16.msra.mxu0 %v1200
        %1215 = vmatmul.bf16.gmra.mxu0 %v1205
        %v1216 = vpop.f32.mrf.mxu0
        %v1217 = vadd.f32 %v1190, %v1216
        %v1218 = vpop.f32.mrf.mxu0
        %1219 = vdwg.mxu0
        %v1220 = vmax.f32 %v1217, 0.0
        %v1221 = vpack.c.bf16 %v1220, %v1220
        %v1222 = vld [vmem:[%s14] sm:$0xf]
        %v1223 = vld [vmem:[%s14 + $0x4] sm:$0xf]
        %v1224 = vld [vmem:[%s14 + $0x8] sm:$0xf]
        %v1225 = vld [vmem:[%s14 + $0xc] sm:$0xf]
        %v1226 = vld [vmem:[%s14 + $0x10] sm:$0xf]
        %v1227 = vld [vmem:[%s14 + $0x14] sm:$0xf]
        %v1228 = vld [vmem:[%s14 + $0x18] sm:$0xf]
        %v1229 = vld [vmem:[%s14 + $0x1c] sm:$0xf]
        %v1230 = vld [vmem:[%s15] sm:$0x1]
        %v1232 = vperm.slane %v1230, 0
        %v1242 = vunpack.c.l.b16 %v1222
        %v1243 = vunpack.c.l.b16 %v1223
        %v1244 = vunpack.c.l.b16 %v1224
        %v1245 = vunpack.c.l.b16 %v1225
        %v1246 = vunpack.c.l.b16 %v1226
        %v1247 = vunpack.c.l.b16 %v1227
        %v1248 = vunpack.c.l.b16 %v1228
        %v1249 = vunpack.c.l.b16 %v1229
        %v1250 = vpack.c.b16 %v1243, %v1242
        %v1251 = vpack.c.b16 %v1245, %v1244
        %v1252 = vpack.c.b16 %v1247, %v1246
        %v1253 = vpack.c.b16 %v1249, %v1248
        %vm1258 = vcmask 523264
        %v1260 = vsel %vm1258, %v1221, 0
        %1262 = vmatpush.bf16.msra.mxu0 0
        %1263 = vmatpush.bf16.msra.mxu0 0
        %1264 = vmatpush.bf16.msra.mxu0 0
        %1265 = vmatpush.bf16.msra.mxu0 0
        %1266 = vmatpush.bf16.msra.mxu0 %v1253
        %1267 = vmatpush.bf16.msra.mxu0 %v1252
        %1268 = vmatpush.bf16.msra.mxu0 %v1251
        %1269 = vmatpush.bf16.msra.mxu0 %v1250
        %1270 = vmatmul.bf16.gmra.mxu0 %v1260
        %v1271 = vpop.f32.mrf.mxu0
        %v1272 = vadd.f32 %v1232, %v1271
        %v1273 = vpop.f32.mrf.mxu0
        %1274 = vdwg.mxu0
        %v1275 = vadd.f32 %v1182, %v1272
        %v1276 = vsel %vm788, %v1275, 0.0
        %1277 = vadd.xlane.f32.xlu0 %v1276
        %v1278 = vpop.xlane.xlu0 %1277
        %v1279 = vmul.f32 %v1278, %v1153
        %v1280 = vsub.f32 %v1275, %v1279
        %v1281 = vmul.f32 %v1280, %v1280
        %v1282 = vsel %vm788, %v1281, 0.0
        %1283 = vadd.xlane.f32.xlu0 %v1282
        %v1284 = vpop.xlane.xlu0 %1283
        %v1285 = vmul.f32 %v1284, %v1153
        %v1286 = vadd.f32 %v1285, 1e-05
        %v1287 = vrsqrt.pop %v1286
        %v1288 = vmul.f32 %v1287, %v1286
        %v1289 = vmul.f32 %v1288, %v1287
        %v1290 = vmul.f32 0.5, %v1289
        %v1291 = vsub.f32 1.5, %v1290
        %v1292 = vmul.f32 %v1287, %v1291
        %vm1293 = vweird.f32 %v1286
        %vm1294 = vweird.f32 %v1287
        %vm1295 = vmor %vm1293, %vm1294
        %v1296 = vsel %vm1295, %v1287, %v1292
        %v1297 = vmul.f32 %v1280, %v1296
        %v1298 = vld [vmem:[%s16] sm:$0x1]
        %v1300 = vperm.slane %v1298, 0
        %v1302 = vmul.f32 %v1297, %v1300
        %v1303 = vld [vmem:[%s17] sm:$0x1]
        %v1305 = vperm.slane %v1303, 0
        %v1307 = vadd.f32 %v1302, %v1305
        %1308 = vst.msk [vmem:[%s677] sm:$0xff] %vm788, %v1307
        %s1309 = sand.u32 %s449, 1
        %s1310 = scalar_lea.sflag [#allocation6], %s1309
        %s1311 = sand.u32 %s449, 1
        %s1312 = smul.addr %s1311, 8
        %s1313 = scalar_lea.vmem [#allocation12], %s1312
        // Predicated region
        $region113: #{tpu_custom_call.1} parent=91 // pred_check
          %p1314 = pneg %p459
        $region114: #{tpu_custom_call.1} parent=91 // pred_check_branch
          %1316 = sbr.rel (%p1314) target = $region116
        $region115: #{tpu_custom_call.1} parent=91 // pred_region
          %1318 = vsyncadd %s1310, 0
          %s1319 = sadd.s32 %s42, %s41
          %s1320 = smul.addr %s1319, 8
          %s1321 = scalar_lea.hbm %s18, %s1320
          %s1323 = sshll.u32 %s1313, 4
          %s1324 = int_to_ptr.vmem [resolvable:$true] %s1323
          %s1325 = sshll.u32 %s1321, 4
          %s1326 = int_to_ptr.hbm [resolvable:$true] %s1325
          %1328 = dma.vmem_to_hbm [thread:$0]  %s1324, 128, %s1326, %s1310
        $region116: #{tpu_custom_call.1} parent=91 // pred_fallthru
          _
      $region92: #{tpu_custom_call.1} parent=5 // pred_fallthru
        _
      %p1329 = scmp.le.s32.totalorder 2, %s32
      // Predicated region
      $region117: #{tpu_custom_call.1} parent=5 // pred_check
        %p1330 = pneg %p1329
      $region118: #{tpu_custom_call.1} parent=5 // pred_check_branch
        %1332 = sbr.rel (%p1330) target = $region120
      $region119: #{tpu_custom_call.1} parent=5 // pred_region
        %s1333 = ssub.s32 %s32, 2
        // Predicated region
        $region121: #{tpu_custom_call.1} parent=119 // pred_check
          %p1334 = pneg %p465
        $region122: #{tpu_custom_call.1} parent=119 // pred_check_branch
          %1336 = sbr.rel (%p1334) target = $region124
        $region123: #{tpu_custom_call.1} parent=119 // pred_region
          %s1337 = sand.u32 %s450, 1
          %s1338 = scalar_lea.sflag [#allocation6], %s1337
          %s1339 = sand.u32 %s450, 1
          %s1340 = smul.addr %s1339, 8
          %s1341 = scalar_lea.vmem [#allocation12], %s1340
          %1343 = dma.done %s1338, 128
        $region124: #{tpu_custom_call.1} parent=119 // pred_fallthru
          _
      $region120: #{tpu_custom_call.1} parent=5 // pred_fallthru
        _
    $region6: #{tpu_custom_call.1} parent=1 // loop_footer
      %s36 = sadd.s32 1, %s32
    $region7: #{tpu_custom_call.1} parent=1 // loop_footer_branch
      %31 = sbr.rel target = $region3
    $region8: #{tpu_custom_call.1} parent=1 // loop_exit
      _
    %1344 = vsyncpa [#allocation5], 1
    %s1345 = scalar_lea.sflag [#allocation5], 1
    %1346 = vsyncpa %s1345, 1
    %1347 = vsyncpa [#allocation8], 1
    %1348 = vsyncpa [#allocation11], 1
    %1349 = vsyncpa [#allocation6], 1
    %s1350 = scalar_lea.sflag [#allocation6], 1
    %1351 = vsyncpa %s1350, 1

</llo_original>
